<compile_context>
chip_gen: v7x
topology: tpu7x:2x2x1
jax: 0.10.0
libtpu: 0.0.40
codegen_flags: <defaults>
</compile_context>

<pallas_src>
import functools

import jax
import jax.numpy as jnp
from jax.experimental import pallas as pl
from jax.experimental.pallas import tpu as pltpu


def autopad(k, p=None, d=1):
    if d > 1:
        k = d * (k - 1) + 1 if isinstance(k, int) else [d * (x - 1) + 1 for x in k]
    if p is None:
        p = k // 2 if isinstance(k, int) else [x // 2 for x in k]
    return p


def _make_kernel(K, THO, fold_taps):
    def kernel(x_ref, w_ref, b_ref, o_ref):
        """Grid step = (batch n, H-strip i, Cout-tile j).

        x_ref: (1, Hp, Wp, Cin)    bf16 padded image (resident per n)
        w_ref: (K*K*Cin, TCO)      bf16 HWIO weights, flattened, BN scale folded in
        b_ref: (1, TCO)            f32 folded BN bias
        o_ref: (1, THO, Wo, TCO)   f32 output strip
        """
        Cin = x_ref.shape[3]
        _, _, Wo, TCO = o_ref.shape
        Hs = THO + K - 1                              # strip rows incl. halo

        i = pl.program_id(1)
        row0 = i * THO
        if THO % 8 == 0:
            row0 = pl.multiple_of(row0, 8)
        strip = x_ref[0, pl.ds(row0, Hs), :, :]       # (Hs, Wp, Cin) bf16

        # Hoist the K W-shifted windows (reused by every kh tap): K, not K*K, sublane slices.
        shifted = [strip[:, kw:kw + Wo, :] for kw in range(K)]    # K x (Hs, Wo, Cin)

        if fold_taps:
            # im2col: one (THO, Wo, K*K*Cin) x (K*K*Cin, TCO) MXU contraction.
            cols = [shifted[kw][kh:kh + THO] for kh in range(K) for kw in range(K)]
            patches = jnp.concatenate(cols, axis=-1)  # (THO, Wo, K*K*Cin)
            acc = jax.lax.dot_general(
                patches, w_ref[...],
                dimension_numbers=(((2,), (0,)), ((), ())),
                preferred_element_type=jnp.float32)   # (THO, Wo, TCO) f32
        else:
            # Fallback: per-tap accumulation (contraction K = Cin).
            acc = jnp.zeros((THO, Wo, TCO), jnp.float32)
            for kh in range(K):
                for kw in range(K):
                    t0 = (kh * K + kw) * Cin
                    w_tap = w_ref[t0:t0 + Cin, :]     # (Cin, TCO)
                    acc += jax.lax.dot_general(
                        shifted[kw][kh:kh + THO], w_tap,
                        dimension_numbers=(((2,), (0,)), ((), ())),
                        preferred_element_type=jnp.float32)

        y = acc + b_ref[0]                            # folded BatchNorm (eval) bias
        y = y * jax.nn.sigmoid(y)                     # SiLU (EUP)
        o_ref[0] = y.astype(o_ref.dtype)

    return kernel


@functools.partial(jax.jit, static_argnames=("k", "s", "p", "d", "eps", "fold_taps"))
def _conv_bn_silu_impl(x_nchw, w_oihw, gamma, beta, run_mean, run_var,
                       *, k, s, p, d, eps, fold_taps):
    assert s == 1 and d == 1, "only stride=1, dilation=1 implemented"
    pad = autopad(k, p, d)
    N, C1, H, W = x_nchw.shape
    C2, C1w, KH, KW = w_oihw.shape
    assert C1w == C1 and KH == k and KW == k, "grouped conv (g>1) not supported"

    Hp, Wp = H + 2 * pad, W + 2 * pad
    Ho, Wo = Hp - k + 1, Wp - k + 1                   # stride 1 (handles even k too)

    # NCHW -> NHWC, zero-pad, bf16 (plain XLA glue).
    x_nhwc = jnp.transpose(x_nchw, (0, 2, 3, 1)).astype(jnp.bfloat16)
    x_pad = jnp.pad(x_nhwc, ((0, 0), (pad, pad), (pad, pad), (0, 0)))

    # Fold BatchNorm (eval mode) into conv weights + per-channel bias.
    scale = gamma.astype(jnp.float32) * jax.lax.rsqrt(run_var.astype(jnp.float32) + eps)
    bias = (beta.astype(jnp.float32) - run_mean.astype(jnp.float32) * scale).reshape(1, C2)
    w_hwio = jnp.transpose(w_oihw, (2, 3, 1, 0)).astype(jnp.float32) * scale
    w_flat = w_hwio.reshape(k * k * C1, C2).astype(jnp.bfloat16)   # (K*K*Cin, Cout)

    # Tile sizes: 8-row output strips when divisible; 128-lane Cout tiles when possible.
    THO = 8 if Ho % 8 == 0 else Ho
    TCO = 128 if C2 % 128 == 0 else C2
    grid = (N, Ho // THO, C2 // TCO)

    out_nhwc = pl.pallas_call(
        _make_kernel(k, THO, fold_taps),
        out_shape=jax.ShapeDtypeStruct((N, Ho, Wo, C2), jnp.float32),
        grid_spec=pltpu.PrefetchScalarGridSpec(
            num_scalar_prefetch=0,
            grid=grid,
            in_specs=[
                pl.BlockSpec((1, Hp, Wp, C1), lambda n, i, j: (n, 0, 0, 0)),
                pl.BlockSpec((k * k * C1, TCO), lambda n, i, j: (0, j)),
                pl.BlockSpec((1, TCO), lambda n, i, j: (0, j)),
            ],
            out_specs=pl.BlockSpec((1, THO, Wo, TCO), lambda n, i, j: (n, i, 0, j)),
        ),
        compiler_params=pltpu.CompilerParams(
            dimension_semantics=("parallel", "parallel", "parallel"),
            vmem_limit_bytes=32 * 1024 * 1024),
    )(x_pad, w_flat, bias)

    return jnp.transpose(out_nhwc, (0, 3, 1, 2))      # back to PyTorch NCHW


def conv_bn_silu(x_nchw, w_oihw, gamma, beta, run_mean, run_var,
                 *, k=3, s=1, p=None, d=1, eps=1e-5):
    """Conv(c1, c2, k, s, p, g=1, d=1, act=True).forward with BatchNorm in eval mode."""
    args = (x_nchw, w_oihw, gamma, beta, run_mean, run_var)
    kwargs = dict(k=k, s=s, p=p, d=d, eps=eps)
    try:
        out = _conv_bn_silu_impl(*args, **kwargs, fold_taps=True)
        return jax.block_until_ready(out)
    except Exception:
        # Fallback if the lane-dim concatenate of the im2col path does not lower.
        return _conv_bn_silu_impl(*args, **kwargs, fold_taps=False)


def _reference(x_nchw, w_oihw, gamma, beta, run_mean, run_var, *, k, eps=1e-5):
    """Pure-XLA reference using identical bf16 operands / f32 accumulation."""
    pad = autopad(k)
    scale = gamma.astype(jnp.float32) * jax.lax.rsqrt(run_var.astype(jnp.float32) + eps)
    bias = beta.astype(jnp.float32) - run_mean.astype(jnp.float32) * scale
    w_hwio = (jnp.transpose(w_oihw, (2, 3, 1, 0)).astype(jnp.float32)
              * scale).astype(jnp.bfloat16)
    x_nhwc = jnp.transpose(x_nchw, (0, 2, 3, 1)).astype(jnp.bfloat16)
    y = jax.lax.conv_general_dilated(
        x_nhwc, w_hwio, window_strides=(1, 1),
        padding=[(pad, pad), (pad, pad)],
        dimension_numbers=("NHWC", "HWIO", "NHWC"),
        preferred_element_type=jnp.float32)
    y = y + bias[None, None, None, :]
    y = y * jax.nn.sigmoid(y)
    return jnp.transpose(y, (0, 3, 1, 2))


if __name__ == "__main__":
    # Conv(c1=4, c2=8, k=3, s=1) on x of shape (2, 4, 16, 16), NCHW.
    N, C1, H, W = 2, 4, 16, 16
    C2, K = 8, 3

    key = jax.random.PRNGKey(0)
    kx, kw_, kg, kb, km, kv = jax.random.split(key, 6)

    x = jax.random.normal(kx, (N, C1, H, W), dtype=jnp.float32)
    w = jax.random.normal(kw_, (C2, C1, K, K), dtype=jnp.float32) * 0.1   # Conv2d weight, OIHW
    gamma = 1.0 + 0.1 * jax.random.normal(kg, (C2,), dtype=jnp.float32)    # BN weight
    beta = 0.1 * jax.random.normal(kb, (C2,), dtype=jnp.float32)           # BN bias
    run_mean = 0.05 * jax.random.normal(km, (C2,), dtype=jnp.float32)      # BN running_mean
    run_var = 1.0 + 0.1 * jax.nn.softplus(jax.random.normal(kv, (C2,), dtype=jnp.float32))

    out = conv_bn_silu(x, w, gamma, beta, run_mean, run_var, k=K, s=1)
    out = jax.block_until_ready(out)

    ref = _reference(x, w, gamma, beta, run_mean, run_var, k=K)
    assert out.shape == (N, C2, H, W), out.shape
    assert jnp.allclose(out, ref, atol=2e-3, rtol=2e-3), float(jnp.max(jnp.abs(out - ref)))

    print("KERNEL_OK")
</pallas_src>

<mosaic_0001>
module attributes {stable_mosaic.version = 11 : i64} {
  func.func @kernel(%arg0: i32, %arg1: i32, %arg2: i32, %arg3: memref<1x18x18x4xbf16, #tpu.memory_space<vmem>>, %arg4: memref<36x8xbf16, #tpu.memory_space<vmem>>, %arg5: memref<1x8xf32, #tpu.memory_space<vmem>>, %arg6: memref<1x8x16x8xf32, #tpu.memory_space<vmem>>) attributes {dimension_semantics = [#tpu.dimension_semantics<parallel>, #tpu.dimension_semantics<parallel>, #tpu.dimension_semantics<parallel>], iteration_bounds = array<i64: 2, 2, 1>, scalar_prefetch = 0 : i64, scratch_operands = 0 : i64, tpu.core_type = #tpu.core_type<tc>, window_params = [{transform_indices = @transform_0, window_bounds = array<i64: 1, 18, 18, 4>}, {transform_indices = @transform_1, window_bounds = array<i64: 36, 8>}, {transform_indices = @transform_2, window_bounds = array<i64: 1, 8>}, {transform_indices = @transform_3, window_bounds = array<i64: 1, 8, 16, 8>}]} {
    %c8_i32 = arith.constant 8 : i32
    %0 = arith.muli %arg1, %c8_i32 : i32
    %1 = tpu.assume_multiple %0, 8 : i32
    %c0 = arith.constant 0 : index
    %2 = arith.index_cast %1 : i32 to index
    %c0_0 = arith.constant 0 : index
    %c0_1 = arith.constant 0 : index
    %3 = vector.load %arg3[%c0, %2, %c0_0, %c0_1] : memref<1x18x18x4xbf16, #tpu.memory_space<vmem>>, vector<1x10x18x4xbf16>
    %4 = vector.shape_cast %3 : vector<1x10x18x4xbf16> to vector<10x18x4xbf16>
    %5 = vector.extract_strided_slice %4 {offsets = [0, 0, 0], sizes = [10, 16, 4], strides = [1, 1, 1]} : vector<10x18x4xbf16> to vector<10x16x4xbf16>
    %6 = vector.extract_strided_slice %4 {offsets = [0, 1, 0], sizes = [10, 16, 4], strides = [1, 1, 1]} : vector<10x18x4xbf16> to vector<10x16x4xbf16>
    %7 = vector.extract_strided_slice %4 {offsets = [0, 2, 0], sizes = [10, 16, 4], strides = [1, 1, 1]} : vector<10x18x4xbf16> to vector<10x16x4xbf16>
    %8 = vector.extract_strided_slice %5 {offsets = [0, 0, 0], sizes = [8, 16, 4], strides = [1, 1, 1]} : vector<10x16x4xbf16> to vector<8x16x4xbf16>
    %9 = vector.extract_strided_slice %6 {offsets = [0, 0, 0], sizes = [8, 16, 4], strides = [1, 1, 1]} : vector<10x16x4xbf16> to vector<8x16x4xbf16>
    %10 = vector.extract_strided_slice %7 {offsets = [0, 0, 0], sizes = [8, 16, 4], strides = [1, 1, 1]} : vector<10x16x4xbf16> to vector<8x16x4xbf16>
    %11 = vector.extract_strided_slice %5 {offsets = [1, 0, 0], sizes = [8, 16, 4], strides = [1, 1, 1]} : vector<10x16x4xbf16> to vector<8x16x4xbf16>
    %12 = vector.extract_strided_slice %6 {offsets = [1, 0, 0], sizes = [8, 16, 4], strides = [1, 1, 1]} : vector<10x16x4xbf16> to vector<8x16x4xbf16>
    %13 = vector.extract_strided_slice %7 {offsets = [1, 0, 0], sizes = [8, 16, 4], strides = [1, 1, 1]} : vector<10x16x4xbf16> to vector<8x16x4xbf16>
    %14 = vector.extract_strided_slice %5 {offsets = [2, 0, 0], sizes = [8, 16, 4], strides = [1, 1, 1]} : vector<10x16x4xbf16> to vector<8x16x4xbf16>
    %15 = vector.extract_strided_slice %6 {offsets = [2, 0, 0], sizes = [8, 16, 4], strides = [1, 1, 1]} : vector<10x16x4xbf16> to vector<8x16x4xbf16>
    %16 = vector.extract_strided_slice %7 {offsets = [2, 0, 0], sizes = [8, 16, 4], strides = [1, 1, 1]} : vector<10x16x4xbf16> to vector<8x16x4xbf16>
    %17 = tpu.concatenate %8, %9, %10, %11, %12, %13, %14, %15, %16 in 2 : vector<8x16x4xbf16>, vector<8x16x4xbf16>, vector<8x16x4xbf16>, vector<8x16x4xbf16>, vector<8x16x4xbf16>, vector<8x16x4xbf16>, vector<8x16x4xbf16>, vector<8x16x4xbf16>, vector<8x16x4xbf16> -> vector<8x16x36xbf16>
    %c0_2 = arith.constant 0 : index
    %c0_3 = arith.constant 0 : index
    %18 = vector.load %arg4[%c0_2, %c0_3] : memref<36x8xbf16, #tpu.memory_space<vmem>>, vector<36x8xbf16>
    %cst = arith.constant dense<0.000000e+00> : vector<8x16x8xf32>
    %19 = tpu.matmul %17, %18, %cst {dimension_numbers = #tpu.dot_dimension_numbers<[2], [0], [0, 1], [1], [0, 0, 0, 1, 1, 1], [], []>} : vector<8x16x36xbf16>, vector<36x8xbf16>, vector<8x16x8xf32> -> vector<8x16x8xf32>
    %c0_4 = arith.constant 0 : index
    %c0_5 = arith.constant 0 : index
    %20 = vector.load %arg5[%c0_4, %c0_5] : memref<1x8xf32, #tpu.memory_space<vmem>>, vector<1x8xf32>
    %21 = vector.shape_cast %20 : vector<1x8xf32> to vector<8xf32>
    %22 = vector.shape_cast %21 : vector<8xf32> to vector<1x1x8xf32>
    %23 = vector.broadcast %22 : vector<1x1x8xf32> to vector<8x16x8xf32>
    %24 = arith.addf %19, %23 : vector<8x16x8xf32>
    %25 = arith.negf %24 : vector<8x16x8xf32>
    %26 = math.exp %25 : vector<8x16x8xf32>
    %cst_6 = arith.constant 1.000000e+00 : f32
    %27 = vector.broadcast %cst_6 : f32 to vector<8x16x8xf32>
    %28 = arith.addf %27, %26 : vector<8x16x8xf32>
    %29 = arith.divf %27, %28 : vector<8x16x8xf32>
    %30 = arith.mulf %24, %29 : vector<8x16x8xf32>
    %c0_7 = arith.constant 0 : index
    %c0_8 = arith.constant 0 : index
    %c0_9 = arith.constant 0 : index
    %c0_10 = arith.constant 0 : index
    %31 = vector.load %arg6[%c0_7, %c0_8, %c0_9, %c0_10] : memref<1x8x16x8xf32, #tpu.memory_space<vmem>>, vector<1x8x16x8xf32>
    %32 = vector.shape_cast %31 : vector<1x8x16x8xf32> to vector<8x16x8xf32>
    %33 = vector.shape_cast %30 : vector<8x16x8xf32> to vector<1x8x16x8xf32>
    tpu.vector_store %arg6[%c0_7, %c0_8, %c0_9, %c0_10], %33 {strides = array<i32>} : memref<1x8x16x8xf32, #tpu.memory_space<vmem>>, vector<1x8x16x8xf32>,
    return
  }
  func.func @transform_0(%arg0: i32, %arg1: i32, %arg2: i32) -> (i32, i32, i32, i32) {
    %c0_i32 = arith.constant 0 : i32
    %c0_i32_0 = arith.constant 0 : i32
    %c0_i32_1 = arith.constant 0 : i32
    %c0_i32_2 = arith.constant 0 : i32
    return %arg0, %c0_i32, %c0_i32_0, %c0_i32_1 : i32, i32, i32, i32
  }
  func.func @transform_1(%arg0: i32, %arg1: i32, %arg2: i32) -> (i32, i32) {
    %c0_i32 = arith.constant 0 : i32
    %c0_i32_0 = arith.constant 0 : i32
    return %c0_i32, %arg2 : i32, i32
  }
  func.func @transform_2(%arg0: i32, %arg1: i32, %arg2: i32) -> (i32, i32) {
    %c0_i32 = arith.constant 0 : i32
    %c0_i32_0 = arith.constant 0 : i32
    return %c0_i32, %arg2 : i32, i32
  }
  func.func @transform_3(%arg0: i32, %arg1: i32, %arg2: i32) -> (i32, i32, i32, i32) {
    %c0_i32 = arith.constant 0 : i32
    %c0_i32_0 = arith.constant 0 : i32
    return %arg0, %arg1, %c0_i32, %arg2 : i32, i32, i32, i32
  }
}

module attributes {stable_mosaic.version = 11 : i64} {
  func.func @kernel(%arg0: i32, %arg1: i32, %arg2: i32, %arg3: memref<1x18x18x4xbf16, #tpu.memory_space<vmem>>, %arg4: memref<36x8xbf16, #tpu.memory_space<vmem>>, %arg5: memref<1x8xf32, #tpu.memory_space<vmem>>, %arg6: memref<1x8x16x8xf32, #tpu.memory_space<vmem>>) attributes {dimension_semantics = [#tpu.dimension_semantics<parallel>, #tpu.dimension_semantics<parallel>, #tpu.dimension_semantics<parallel>], iteration_bounds = array<i64: 2, 2, 1>, scalar_prefetch = 0 : i64, scratch_operands = 0 : i64, tpu.core_type = #tpu.core_type<tc>, window_params = [{transform_indices = @transform_0, window_bounds = array<i64: 1, 18, 18, 4>}, {transform_indices = @transform_1, window_bounds = array<i64: 36, 8>}, {transform_indices = @transform_2, window_bounds = array<i64: 1, 8>}, {transform_indices = @transform_3, window_bounds = array<i64: 1, 8, 16, 8>}]} {
    %c8_i32 = arith.constant 8 : i32
    %0 = arith.muli %arg1, %c8_i32 : i32
    %1 = tpu.assume_multiple %0, 8 : i32
    %c0 = arith.constant 0 : index
    %2 = arith.index_cast %1 : i32 to index
    %c0_0 = arith.constant 0 : index
    %c0_1 = arith.constant 0 : index
    %3 = vector.load %arg3[%c0, %2, %c0_0, %c0_1] : memref<1x18x18x4xbf16, #tpu.memory_space<vmem>>, vector<1x10x18x4xbf16>
    %4 = vector.shape_cast %3 : vector<1x10x18x4xbf16> to vector<10x18x4xbf16>
    %5 = vector.extract_strided_slice %4 {offsets = [0, 0, 0], sizes = [10, 16, 4], strides = [1, 1, 1]} : vector<10x18x4xbf16> to vector<10x16x4xbf16>
    %6 = vector.extract_strided_slice %4 {offsets = [0, 1, 0], sizes = [10, 16, 4], strides = [1, 1, 1]} : vector<10x18x4xbf16> to vector<10x16x4xbf16>
    %7 = vector.extract_strided_slice %4 {offsets = [0, 2, 0], sizes = [10, 16, 4], strides = [1, 1, 1]} : vector<10x18x4xbf16> to vector<10x16x4xbf16>
    %cst = arith.constant 0.000000e+00 : f32
    %8 = vector.broadcast %cst : f32 to vector<8x16x8xf32>
    %c0_2 = arith.constant 0 : index
    %c0_3 = arith.constant 0 : index
    %9 = vector.load %arg4[%c0_2, %c0_3] : memref<36x8xbf16, #tpu.memory_space<vmem>>, vector<4x8xbf16>
    %10 = vector.extract_strided_slice %5 {offsets = [0, 0, 0], sizes = [8, 16, 4], strides = [1, 1, 1]} : vector<10x16x4xbf16> to vector<8x16x4xbf16>
    %cst_4 = arith.constant dense<0.000000e+00> : vector<8x16x8xf32>
    %11 = tpu.matmul %10, %9, %cst_4 {dimension_numbers = #tpu.dot_dimension_numbers<[2], [0], [0, 1], [1], [0, 0, 0, 1, 1, 1], [], []>} : vector<8x16x4xbf16>, vector<4x8xbf16>, vector<8x16x8xf32> -> vector<8x16x8xf32>
    %12 = arith.addf %8, %11 : vector<8x16x8xf32>
    %c4 = arith.constant 4 : index
    %c0_5 = arith.constant 0 : index
    %13 = vector.load %arg4[%c4, %c0_5] : memref<36x8xbf16, #tpu.memory_space<vmem>>, vector<4x8xbf16>
    %14 = vector.extract_strided_slice %6 {offsets = [0, 0, 0], sizes = [8, 16, 4], strides = [1, 1, 1]} : vector<10x16x4xbf16> to vector<8x16x4xbf16>
    %cst_6 = arith.constant dense<0.000000e+00> : vector<8x16x8xf32>
    %15 = tpu.matmul %14, %13, %cst_6 {dimension_numbers = #tpu.dot_dimension_numbers<[2], [0], [0, 1], [1], [0, 0, 0, 1, 1, 1], [], []>} : vector<8x16x4xbf16>, vector<4x8xbf16>, vector<8x16x8xf32> -> vector<8x16x8xf32>
    %16 = arith.addf %12, %15 : vector<8x16x8xf32>
    %c8 = arith.constant 8 : index
    %c0_7 = arith.constant 0 : index
    %17 = vector.load %arg4[%c8, %c0_7] : memref<36x8xbf16, #tpu.memory_space<vmem>>, vector<4x8xbf16>
    %18 = vector.extract_strided_slice %7 {offsets = [0, 0, 0], sizes = [8, 16, 4], strides = [1, 1, 1]} : vector<10x16x4xbf16> to vector<8x16x4xbf16>
    %cst_8 = arith.constant dense<0.000000e+00> : vector<8x16x8xf32>
    %19 = tpu.matmul %18, %17, %cst_8 {dimension_numbers = #tpu.dot_dimension_numbers<[2], [0], [0, 1], [1], [0, 0, 0, 1, 1, 1], [], []>} : vector<8x16x4xbf16>, vector<4x8xbf16>, vector<8x16x8xf32> -> vector<8x16x8xf32>
    %20 = arith.addf %16, %19 : vector<8x16x8xf32>
    %c12 = arith.constant 12 : index
    %c0_9 = arith.constant 0 : index
    %21 = vector.load %arg4[%c12, %c0_9] : memref<36x8xbf16, #tpu.memory_space<vmem>>, vector<4x8xbf16>
    %22 = vector.extract_strided_slice %5 {offsets = [1, 0, 0], sizes = [8, 16, 4], strides = [1, 1, 1]} : vector<10x16x4xbf16> to vector<8x16x4xbf16>
    %cst_10 = arith.constant dense<0.000000e+00> : vector<8x16x8xf32>
    %23 = tpu.matmul %22, %21, %cst_10 {dimension_numbers = #tpu.dot_dimension_numbers<[2], [0], [0, 1], [1], [0, 0, 0, 1, 1, 1], [], []>} : vector<8x16x4xbf16>, vector<4x8xbf16>, vector<8x16x8xf32> -> vector<8x16x8xf32>
    %24 = arith.addf %20, %23 : vector<8x16x8xf32>
    %c16 = arith.constant 16 : index
    %c0_11 = arith.constant 0 : index
    %25 = vector.load %arg4[%c16, %c0_11] : memref<36x8xbf16, #tpu.memory_space<vmem>>, vector<4x8xbf16>
    %26 = vector.extract_strided_slice %6 {offsets = [1, 0, 0], sizes = [8, 16, 4], strides = [1, 1, 1]} : vector<10x16x4xbf16> to vector<8x16x4xbf16>
    %cst_12 = arith.constant dense<0.000000e+00> : vector<8x16x8xf32>
    %27 = tpu.matmul %26, %25, %cst_12 {dimension_numbers = #tpu.dot_dimension_numbers<[2], [0], [0, 1], [1], [0, 0, 0, 1, 1, 1], [], []>} : vector<8x16x4xbf16>, vector<4x8xbf16>, vector<8x16x8xf32> -> vector<8x16x8xf32>
    %28 = arith.addf %24, %27 : vector<8x16x8xf32>
    %c20 = arith.constant 20 : index
    %c0_13 = arith.constant 0 : index
    %29 = vector.load %arg4[%c20, %c0_13] : memref<36x8xbf16, #tpu.memory_space<vmem>>, vector<4x8xbf16>
    %30 = vector.extract_strided_slice %7 {offsets = [1, 0, 0], sizes = [8, 16, 4], strides = [1, 1, 1]} : vector<10x16x4xbf16> to vector<8x16x4xbf16>
    %cst_14 = arith.constant dense<0.000000e+00> : vector<8x16x8xf32>
    %31 = tpu.matmul %30, %29, %cst_14 {dimension_numbers = #tpu.dot_dimension_numbers<[2], [0], [0, 1], [1], [0, 0, 0, 1, 1, 1], [], []>} : vector<8x16x4xbf16>, vector<4x8xbf16>, vector<8x16x8xf32> -> vector<8x16x8xf32>
    %32 = arith.addf %28, %31 : vector<8x16x8xf32>
    %c24 = arith.constant 24 : index
    %c0_15 = arith.constant 0 : index
    %33 = vector.load %arg4[%c24, %c0_15] : memref<36x8xbf16, #tpu.memory_space<vmem>>, vector<4x8xbf16>
    %34 = vector.extract_strided_slice %5 {offsets = [2, 0, 0], sizes = [8, 16, 4], strides = [1, 1, 1]} : vector<10x16x4xbf16> to vector<8x16x4xbf16>
    %cst_16 = arith.constant dense<0.000000e+00> : vector<8x16x8xf32>
    %35 = tpu.matmul %34, %33, %cst_16 {dimension_numbers = #tpu.dot_dimension_numbers<[2], [0], [0, 1], [1], [0, 0, 0, 1, 1, 1], [], []>} : vector<8x16x4xbf16>, vector<4x8xbf16>, vector<8x16x8xf32> -> vector<8x16x8xf32>
    %36 = arith.addf %32, %35 : vector<8x16x8xf32>
    %c28 = arith.constant 28 : index
    %c0_17 = arith.constant 0 : index
    %37 = vector.load %arg4[%c28, %c0_17] : memref<36x8xbf16, #tpu.memory_space<vmem>>, vector<4x8xbf16>
    %38 = vector.extract_strided_slice %6 {offsets = [2, 0, 0], sizes = [8, 16, 4], strides = [1, 1, 1]} : vector<10x16x4xbf16> to vector<8x16x4xbf16>
    %cst_18 = arith.constant dense<0.000000e+00> : vector<8x16x8xf32>
    %39 = tpu.matmul %38, %37, %cst_18 {dimension_numbers = #tpu.dot_dimension_numbers<[2], [0], [0, 1], [1], [0, 0, 0, 1, 1, 1], [], []>} : vector<8x16x4xbf16>, vector<4x8xbf16>, vector<8x16x8xf32> -> vector<8x16x8xf32>
    %40 = arith.addf %36, %39 : vector<8x16x8xf32>
    %c32 = arith.constant 32 : index
    %c0_19 = arith.constant 0 : index
    %41 = vector.load %arg4[%c32, %c0_19] : memref<36x8xbf16, #tpu.memory_space<vmem>>, vector<4x8xbf16>
    %42 = vector.extract_strided_slice %7 {offsets = [2, 0, 0], sizes = [8, 16, 4], strides = [1, 1, 1]} : vector<10x16x4xbf16> to vector<8x16x4xbf16>
    %cst_20 = arith.constant dense<0.000000e+00> : vector<8x16x8xf32>
    %43 = tpu.matmul %42, %41, %cst_20 {dimension_numbers = #tpu.dot_dimension_numbers<[2], [0], [0, 1], [1], [0, 0, 0, 1, 1, 1], [], []>} : vector<8x16x4xbf16>, vector<4x8xbf16>, vector<8x16x8xf32> -> vector<8x16x8xf32>
    %44 = arith.addf %40, %43 : vector<8x16x8xf32>
    %c0_21 = arith.constant 0 : index
    %c0_22 = arith.constant 0 : index
    %45 = vector.load %arg5[%c0_21, %c0_22] : memref<1x8xf32, #tpu.memory_space<vmem>>, vector<1x8xf32>
    %46 = vector.shape_cast %45 : vector<1x8xf32> to vector<8xf32>
    %47 = vector.shape_cast %46 : vector<8xf32> to vector<1x1x8xf32>
    %48 = vector.broadcast %47 : vector<1x1x8xf32> to vector<8x16x8xf32>
    %49 = arith.addf %44, %48 : vector<8x16x8xf32>
    %50 = arith.negf %49 : vector<8x16x8xf32>
    %51 = math.exp %50 : vector<8x16x8xf32>
    %cst_23 = arith.constant 1.000000e+00 : f32
    %52 = vector.broadcast %cst_23 : f32 to vector<8x16x8xf32>
    %53 = arith.addf %52, %51 : vector<8x16x8xf32>
    %54 = arith.divf %52, %53 : vector<8x16x8xf32>
    %55 = arith.mulf %49, %54 : vector<8x16x8xf32>
    %c0_24 = arith.constant 0 : index
    %c0_25 = arith.constant 0 : index
    %c0_26 = arith.constant 0 : index
    %c0_27 = arith.constant 0 : index
    %56 = vector.load %arg6[%c0_24, %c0_25, %c0_26, %c0_27] : memref<1x8x16x8xf32, #tpu.memory_space<vmem>>, vector<1x8x16x8xf32>
    %57 = vector.shape_cast %56 : vector<1x8x16x8xf32> to vector<8x16x8xf32>
    %58 = vector.shape_cast %55 : vector<8x16x8xf32> to vector<1x8x16x8xf32>
    tpu.vector_store %arg6[%c0_24, %c0_25, %c0_26, %c0_27], %58 {strides = array<i32>} : memref<1x8x16x8xf32, #tpu.memory_space<vmem>>, vector<1x8x16x8xf32>,
    return
  }
  func.func @transform_0(%arg0: i32, %arg1: i32, %arg2: i32) -> (i32, i32, i32, i32) {
    %c0_i32 = arith.constant 0 : i32
    %c0_i32_0 = arith.constant 0 : i32
    %c0_i32_1 = arith.constant 0 : i32
    %c0_i32_2 = arith.constant 0 : i32
    return %arg0, %c0_i32, %c0_i32_0, %c0_i32_1 : i32, i32, i32, i32
  }
  func.func @transform_1(%arg0: i32, %arg1: i32, %arg2: i32) -> (i32, i32) {
    %c0_i32 = arith.constant 0 : i32
    %c0_i32_0 = arith.constant 0 : i32
    return %c0_i32, %arg2 : i32, i32
  }
  func.func @transform_2(%arg0: i32, %arg1: i32, %arg2: i32) -> (i32, i32) {
    %c0_i32 = arith.constant 0 : i32
    %c0_i32_0 = arith.constant 0 : i32
    return %c0_i32, %arg2 : i32, i32
  }
  func.func @transform_3(%arg0: i32, %arg1: i32, %arg2: i32) -> (i32, i32, i32, i32) {
    %c0_i32 = arith.constant 0 : i32
    %c0_i32_0 = arith.constant 0 : i32
    return %arg0, %arg1, %c0_i32, %arg2 : i32, i32, i32, i32
  }
}

</mosaic_0001>

<llo_original>
// kernel: _conv_bn_silu_impl.1
$region0: #{_conv_bn_silu_impl.1}
  #allocation0 [shape = 'u32[]', space=smem, size = 0x4, offset = 0x4, fixed_abs, tag = 'smem constant byte address 0x4 - core index']
  #allocation1 [shape = 'u32[144,128]{1,0:T(1,128)}', space=vmem, size = 0x12000, scoped, tag = 'internal scratch']
  %s0 = inlined_call_operand.vmem [shape: bf16[2,18,18,4], index: 0, kind: input, shape index: {}]
  %s1 = inlined_call_operand.vmem [shape: bf16[36,8], index: 1, kind: input, shape index: {}]
  %s2 = inlined_call_operand.vmem [shape: f32[1,8], index: 2, kind: input, shape index: {}]
  %s3 = inlined_call_operand.vmem [shape: f32[2,16,16,8], index: 3, kind: output, shape index: {}]
  %s4 = sld [smem:[#allocation0]]
  $region45: #{_conv_bn_silu_impl.1} parent=0
    _
  %s6 = ssub.s32 1, %s4
  %s7 = scalar_select 0, %s6, %s4
  loop: start=0, step=1, limit=6
  $region2: #{_conv_bn_silu_impl.1} parent=0 // loop_pre_header
    _
  $region3: #{_conv_bn_silu_impl.1} parent=0 // loop_header
    %s9 = sphi 0, %s13
    %p10 = scmp.ge.s32.totalorder %s9, 6
    %s16 = sphi 0, %s35
    %s17 = sphi 0, %s31
    %s18 = sphi 0, %s27
    %s19 = sphi 0, %s16
    %s20 = sphi 0, %s17
    %s21 = sphi 0, %s18
    %s22 = sphi 0, %s19
    %s23 = sphi 0, %s20
    %s24 = sphi 0, %s21
    %s38 = sphi 0, %s40
    %s41 = sphi 0, %s38
    %s42 = sphi 0, %s41
    %s58 = sphi 0, %s42
    %s64 = sphi 0, %s66
    %s67 = sphi 0, %s64
    %s68 = sphi 0, %s67
    %s84 = sphi 0, %s68
    %s90 = sphi 0, %s92
    %s93 = sphi 0, %s90
    %s94 = sphi 0, %s93
    %s110 = sphi 0, %s94
    %s120 = sphi 0, %s122
    %s123 = sphi 0, %s120
    %s124 = sphi 0, %s123
    %s140 = sphi 0, %s124
  $region4: #{_conv_bn_silu_impl.1} parent=0 // loop_header_branch
    %12 = sbr.rel (%p10) target = $region8
  $region5: #{_conv_bn_silu_impl.1} parent=0 // loop_body
    %s14 = ssub.s32 %s9, 1
    %s15 = ssub.s32 %s9, 2
    %s25 = sadd.s32 1, %s18
    %p26 = scmp.ge.s32.totalorder %s25, 1
    %s27 = scalar_select %p26, 0, %s25
    %s28 = sadd.s32 1, %s17
    %s29 = scalar_select %p26, %s28, %s17
    %p30 = scmp.ge.s32.totalorder %s29, 2
    %s31 = scalar_select %p30, 0, %s29
    %s32 = sadd.s32 1, %s16
    %s33 = scalar_select %p30, %s32, %s16
    %p34 = scmp.ge.s32.totalorder %s33, 2
    %s35 = scalar_select %p34, 0, %s33
    %s36 = ssub.s32 %s16, %s35
    %p37 = scmp.eq.s32.totalorder %s36, 0
    %s39 = sadd.s32 %s38, 1
    %s40 = scalar_select %p37, %s38, %s39
    %p43 = pneg %p37
    %p44 = scmp.eq.s32.totalorder %s9, 3
    %p45 = por %p43, %p44
    %p46 = scmp.ne.s32.totalorder %s38, %s41
    %p47 = scmp.eq.s32.totalorder %s9, 0
    %p48 = por %p46, %p47
    %p49 = scmp.ne.s32.totalorder %s38, %s41
    %p50 = scmp.eq.s32.totalorder %s14, 3
    %p51 = por %p49, %p50
    %p52 = scmp.ne.s32.totalorder %s41, %s42
    %p53 = scmp.eq.s32.totalorder %s14, 0
    %p54 = por %p52, %p53
    %p55 = scmp.ne.s32.totalorder %s41, %s42
    %p56 = scmp.eq.s32.totalorder %s15, 3
    %p57 = por %p55, %p56
    %p59 = scmp.ne.s32.totalorder %s42, %s58
    %p60 = scmp.eq.s32.totalorder %s15, 0
    %p61 = por %p59, %p60
    %s62 = ssub.s32 %s18, %s27
    %p63 = scmp.eq.s32.totalorder %s62, 0
    %s65 = sadd.s32 %s64, 1
    %s66 = scalar_select %p63, %s64, %s65
    %p69 = pneg %p63
    %p70 = scmp.eq.s32.totalorder %s9, 3
    %p71 = por %p69, %p70
    %p72 = scmp.ne.s32.totalorder %s64, %s67
    %p73 = scmp.eq.s32.totalorder %s9, 0
    %p74 = por %p72, %p73
    %p75 = scmp.ne.s32.totalorder %s64, %s67
    %p76 = scmp.eq.s32.totalorder %s14, 3
    %p77 = por %p75, %p76
    %p78 = scmp.ne.s32.totalorder %s67, %s68
    %p79 = scmp.eq.s32.totalorder %s14, 0
    %p80 = por %p78, %p79
    %p81 = scmp.ne.s32.totalorder %s67, %s68
    %p82 = scmp.eq.s32.totalorder %s15, 3
    %p83 = por %p81, %p82
    %p85 = scmp.ne.s32.totalorder %s68, %s84
    %p86 = scmp.eq.s32.totalorder %s15, 0
    %p87 = por %p85, %p86
    %s88 = ssub.s32 %s18, %s27
    %p89 = scmp.eq.s32.totalorder %s88, 0
    %s91 = sadd.s32 %s90, 1
    %s92 = scalar_select %p89, %s90, %s91
    %p95 = pneg %p89
    %p96 = scmp.eq.s32.totalorder %s9, 3
    %p97 = por %p95, %p96
    %p98 = scmp.ne.s32.totalorder %s90, %s93
    %p99 = scmp.eq.s32.totalorder %s9, 0
    %p100 = por %p98, %p99
    %p101 = scmp.ne.s32.totalorder %s90, %s93
    %p102 = scmp.eq.s32.totalorder %s14, 3
    %p103 = por %p101, %p102
    %p104 = scmp.ne.s32.totalorder %s93, %s94
    %p105 = scmp.eq.s32.totalorder %s14, 0
    %p106 = por %p104, %p105
    %p107 = scmp.ne.s32.totalorder %s93, %s94
    %p108 = scmp.eq.s32.totalorder %s15, 3
    %p109 = por %p107, %p108
    %p111 = scmp.ne.s32.totalorder %s94, %s110
    %p112 = scmp.eq.s32.totalorder %s15, 0
    %p113 = por %p111, %p112
    %s114 = ssub.s32 %s16, %s35
    %s115 = ssub.s32 %s17, %s31
    %s116 = sor.u32 %s114, %s115
    %s117 = ssub.s32 %s18, %s27
    %s118 = sor.u32 %s116, %s117
    %p119 = scmp.eq.s32.totalorder %s118, 0
    %s121 = sadd.s32 %s120, 1
    %s122 = scalar_select %p119, %s120, %s121
    %p125 = pneg %p119
    %p126 = scmp.eq.s32.totalorder %s9, 3
    %p127 = por %p125, %p126
    %p128 = scmp.ne.s32.totalorder %s120, %s123
    %p129 = scmp.eq.s32.totalorder %s9, 0
    %p130 = por %p128, %p129
    %p131 = scmp.ne.s32.totalorder %s120, %s123
    %p132 = scmp.eq.s32.totalorder %s14, 3
    %p133 = por %p131, %p132
    %p134 = scmp.ne.s32.totalorder %s123, %s124
    %p135 = scmp.eq.s32.totalorder %s14, 0
    %p136 = por %p134, %p135
    %p137 = scmp.ne.s32.totalorder %s123, %s124
    %p138 = scmp.eq.s32.totalorder %s15, 3
    %p139 = por %p137, %p138
    %p141 = scmp.ne.s32.totalorder %s124, %s140
    %p142 = scmp.eq.s32.totalorder %s15, 0
    %p143 = por %p141, %p142
    %p144 = scmp.le.s32.totalorder 1, %s9
    %p145 = scmp.lt.s32.totalorder %s9, 5
    %p146 = pnand %p144, %p145
    %p147 = pneg %p146
    // Predicated region
    $region9: #{_conv_bn_silu_impl.1} parent=5 // pred_check
      _
    $region10: #{_conv_bn_silu_impl.1} parent=5 // pred_check_branch
      %149 = sbr.rel (%p146) target = $region12
    $region11: #{_conv_bn_silu_impl.1} parent=5 // pred_region
      %s150 = ssub.s32 %s9, 1
      // Predicated region
      $region13: #{_conv_bn_silu_impl.1} parent=11 // pred_check
        %p151 = pneg %p80
      $region14: #{_conv_bn_silu_impl.1} parent=11 // pred_check_branch
        %153 = sbr.rel (%p151) target = $region16
      $region15: #{_conv_bn_silu_impl.1} parent=11 // pred_region
        %p154 = scmp.lt.s32.totalorder %s21, 0
        %s155 = scalar_select %p154, %s21, 0
        %s156 = smul.addr %s155, 4
        %s157 = scalar_lea.vmem %s1, %s156
      $region16: #{_conv_bn_silu_impl.1} parent=11 // pred_fallthru
        _
      // Predicated region
      $region17: #{_conv_bn_silu_impl.1} parent=11 // pred_check
        %p158 = pneg %p106
      $region18: #{_conv_bn_silu_impl.1} parent=11 // pred_check_branch
        %160 = sbr.rel (%p158) target = $region20
      $region19: #{_conv_bn_silu_impl.1} parent=11 // pred_region
        %p161 = scmp.lt.s32.totalorder %s21, 0
        %s162 = scalar_select %p161, %s21, 0
        %s163 = scalar_lea.vmem %s2, %s162
      $region20: #{_conv_bn_silu_impl.1} parent=11 // pred_fallthru
        _
    $region12: #{_conv_bn_silu_impl.1} parent=5 // pred_fallthru
      _
    %p164 = scmp.lt.s32.totalorder %s9, 4
    // Predicated region
    $region21: #{_conv_bn_silu_impl.1} parent=5 // pred_check
      %p165 = pneg %p164
    $region22: #{_conv_bn_silu_impl.1} parent=5 // pred_check_branch
      %167 = sbr.rel (%p165) target = $region24
    $region23: #{_conv_bn_silu_impl.1} parent=5 // pred_region
      // Predicated region
      $region25: #{_conv_bn_silu_impl.1} parent=23 // pred_check
        %p168 = pneg %p48
      $region26: #{_conv_bn_silu_impl.1} parent=23 // pred_check_branch
        %170 = sbr.rel (%p168) target = $region28
      $region27: #{_conv_bn_silu_impl.1} parent=23 // pred_region
        %p171 = scmp.lt.s32.totalorder %s16, 1
        %s172 = scalar_select %p171, %s16, 1
        %s173 = smul.addr %s172, 54
        %s174 = smul.addr %s173, 4
        %s175 = scalar_lea.vmem %s0, %s174
      $region28: #{_conv_bn_silu_impl.1} parent=23 // pred_fallthru
        _
    $region24: #{_conv_bn_silu_impl.1} parent=5 // pred_fallthru
      _
    %p176 = scmp.le.s32.totalorder 1, %s9
    %p177 = scmp.lt.s32.totalorder %s9, 5
    %p178 = pnand %p176, %p177
    %p179 = pneg %p178
    // Predicated region
    $region29: #{_conv_bn_silu_impl.1} parent=5 // pred_check
      _
    $region30: #{_conv_bn_silu_impl.1} parent=5 // pred_check_branch
      %181 = sbr.rel (%p178) target = $region32
    $region31: #{_conv_bn_silu_impl.1} parent=5 // pred_region
      %s182 = ssub.s32 %s9, 1
      %p183 = scmp.lt.s32.totalorder %s19, 1
      %s184 = scalar_select %p183, %s19, 1
      %s185 = smul.addr %s184, 54
      %s186 = smul.addr %s185, 4
      %s187 = scalar_lea.vmem %s0, %s186
      %p188 = pneg %p54
      %p189 = pneg %p51
      %p190 = scmp.lt.s32.totalorder %s21, 0
      %s191 = scalar_select %p190, %s21, 0
      %s192 = smul.addr %s191, 4
      %s193 = scalar_lea.vmem %s1, %s192
      %p194 = pneg %p80
      %p195 = pneg %p77
      %p196 = scmp.lt.s32.totalorder %s21, 0
      %s197 = scalar_select %p196, %s21, 0
      %s198 = scalar_lea.vmem %s2, %s197
      %p199 = pneg %p106
      %p200 = pneg %p103
      %p201 = pneg %p136
      %p202 = pneg %p133
      %s203 = smul.u32 8, %s20
      %p204 = scmp.lt.s32.totalorder %s19, 1
      %s205 = scalar_select %p204, %s19, 1
      %p206 = scmp.lt.s32.totalorder %s203, 15
      %s207 = scalar_select %p206, %s203, 15
      %p208 = scmp.lt.s32.totalorder %s21, 0
      %s209 = scalar_select %p208, %s21, 0
      %s210 = smul.addr %s207, 2
      %s211 = sadd.s32 %s209, %s210
      %s212 = smul.addr %s205, 32
      %s213 = sadd.s32 %s211, %s212
      %s214 = smul.addr %s213, 8
      %s215 = scalar_lea.vmem %s3, %s214
      %p216 = scmp.lt.s32.totalorder %s19, 1
      %s217 = scalar_select %p216, %s19, 1
      %s218 = smul.addr %s217, 54
      %s219 = smul.addr %s218, 4
      %s220 = scalar_lea.vmem %s0, %s219
      %p221 = scmp.lt.s32.totalorder %s21, 0
      %s222 = scalar_select %p221, %s21, 0
      %s223 = smul.addr %s222, 4
      %s224 = scalar_lea.vmem %s1, %s223
      %p225 = scmp.lt.s32.totalorder %s21, 0
      %s226 = scalar_select %p225, %s21, 0
      %s227 = scalar_lea.vmem %s2, %s226
      %s228 = smul.u32 8, %s20
      %p229 = scmp.lt.s32.totalorder %s19, 1
      %s230 = scalar_select %p229, %s19, 1
      %p231 = scmp.lt.s32.totalorder %s228, 15
      %s232 = scalar_select %p231, %s228, 15
      %p233 = scmp.lt.s32.totalorder %s21, 0
      %s234 = scalar_select %p233, %s21, 0
      %s235 = smul.addr %s232, 2
      %s236 = sadd.s32 %s234, %s235
      %s237 = smul.addr %s230, 32
      %s238 = sadd.s32 %s236, %s237
      %s239 = smul.addr %s238, 8
      %s240 = scalar_lea.vmem %s3, %s239
      %s241 = smul.u32 8, %s20
      %s243 = smul.u32 %s20, 8
      %s244 = smul.u32 %s243, 3
      %s245 = smul.addr %s244, 4
      %s246 = scalar_lea.vmem %s220, %s245
      %v247 = vld [vmem:[%s246] sm:$0xf]
      %v248 = vld [vmem:[%s246 + $0x4] sm:$0xf]
      %v249 = vld [vmem:[%s246 + $0x8] sm:$0x1]
      %v250 = vld [vmem:[%s246 + $0xc] sm:$0xf]
      %v251 = vld [vmem:[%s246 + $0x10] sm:$0xf]
      %v252 = vld [vmem:[%s246 + $0x14] sm:$0x1]
      %v253 = vld [vmem:[%s246 + $0x18] sm:$0xf]
      %v254 = vld [vmem:[%s246 + $0x1c] sm:$0xf]
      %v255 = vld [vmem:[%s246 + $0x20] sm:$0x1]
      %v256 = vld [vmem:[%s246 + $0x24] sm:$0xf]
      %v257 = vld [vmem:[%s246 + $0x28] sm:$0xf]
      %v258 = vld [vmem:[%s246 + $0x2c] sm:$0x1]
      %v259 = vld [vmem:[%s246 + $0x30] sm:$0xf]
      %v260 = vld [vmem:[%s246 + $0x34] sm:$0xf]
      %v261 = vld [vmem:[%s246 + $0x38] sm:$0x1]
      %v262 = vld [vmem:[%s246 + $0x3c] sm:$0xf]
      %v263 = vld [vmem:[%s246 + $0x40] sm:$0xf]
      %v264 = vld [vmem:[%s246 + $0x44] sm:$0x1]
      %v265 = vld [vmem:[%s246 + $0x48] sm:$0xf]
      %v266 = vld [vmem:[%s246 + $0x4c] sm:$0xf]
      %v267 = vld [vmem:[%s246 + $0x50] sm:$0x1]
      %v268 = vld [vmem:[%s246 + $0x54] sm:$0xf]
      %v269 = vld [vmem:[%s246 + $0x58] sm:$0xf]
      %v270 = vld [vmem:[%s246 + $0x5c] sm:$0x1]
      %v271 = vld [vmem:[%s246 + $0x60] sm:$0xf]
      %v272 = vld [vmem:[%s246 + $0x64] sm:$0xf]
      %v273 = vld [vmem:[%s246 + $0x68] sm:$0x1]
      %v274 = vld [vmem:[%s246 + $0x6c] sm:$0xf]
      %v275 = vld [vmem:[%s246 + $0x70] sm:$0xf]
      %v276 = vld [vmem:[%s246 + $0x74] sm:$0x1]
      %v293 = vunpack.c.l.b16 %v247
      %v294 = vunpack.c.l.b16 %v248
      %v295 = vunpack.c.l.b16 %v250
      %v296 = vunpack.c.l.b16 %v251
      %v297 = vunpack.c.l.b16 %v253
      %v298 = vunpack.c.l.b16 %v254
      %v299 = vunpack.c.l.b16 %v256
      %v300 = vunpack.c.l.b16 %v257
      %v301 = vunpack.c.l.b16 %v259
      %v302 = vunpack.c.l.b16 %v260
      %v303 = vunpack.c.l.b16 %v262
      %v304 = vunpack.c.l.b16 %v263
      %v305 = vunpack.c.l.b16 %v265
      %v306 = vunpack.c.l.b16 %v266
      %v307 = vunpack.c.l.b16 %v268
      %v308 = vunpack.c.l.b16 %v269
      %v309 = vpack.c.b16 %v294, %v293
      %v310 = vpack.c.b16 %v296, %v295
      %v311 = vpack.c.b16 %v298, %v297
      %v312 = vpack.c.b16 %v300, %v299
      %v313 = vpack.c.b16 %v302, %v301
      %v314 = vpack.c.b16 %v304, %v303
      %v315 = vpack.c.b16 %v306, %v305
      %v316 = vpack.c.b16 %v308, %v307
      %v325 = vunpack.c.l.b16 %v249
      %v326 = vunpack.c.l.b16 %v252
      %v327 = vunpack.c.l.b16 %v255
      %v328 = vunpack.c.l.b16 %v258
      %v329 = vunpack.c.l.b16 %v261
      %v330 = vunpack.c.l.b16 %v264
      %v331 = vunpack.c.l.b16 %v267
      %v332 = vunpack.c.l.b16 %v270
      %v333 = vpack.c.b16 %v325, %v325
      %v334 = vpack.c.b16 %v326, %v326
      %v335 = vpack.c.b16 %v327, %v327
      %v336 = vpack.c.b16 %v328, %v328
      %v337 = vpack.c.b16 %v329, %v329
      %v338 = vpack.c.b16 %v330, %v330
      %v339 = vpack.c.b16 %v331, %v331
      %v340 = vpack.c.b16 %v332, %v332
      %vm341 = vsmask.f32 7424
      %v343 = vshrl.u32 %v309, 16
      %v345 = vshll.u32 %v309, 16
      %v347 = vrot.slane %v345, 1
      %v348 = vor.u32 %v343, %v347
      %v350 = vshll.u32 %v333, 16
      %v352 = vrot.slane %v350, 1
      %v353 = vsel %vm341, %v348, %v352
      %v355 = vshrl.u32 %v310, 16
      %v357 = vshll.u32 %v310, 16
      %v359 = vrot.slane %v357, 1
      %v360 = vor.u32 %v355, %v359
      %v362 = vshll.u32 %v334, 16
      %v364 = vrot.slane %v362, 1
      %v365 = vsel %vm341, %v360, %v364
      %v367 = vshrl.u32 %v311, 16
      %v369 = vshll.u32 %v311, 16
      %v371 = vrot.slane %v369, 1
      %v372 = vor.u32 %v367, %v371
      %v374 = vshll.u32 %v335, 16
      %v376 = vrot.slane %v374, 1
      %v377 = vsel %vm341, %v372, %v376
      %v379 = vshrl.u32 %v312, 16
      %v381 = vshll.u32 %v312, 16
      %v383 = vrot.slane %v381, 1
      %v384 = vor.u32 %v379, %v383
      %v386 = vshll.u32 %v336, 16
      %v388 = vrot.slane %v386, 1
      %v389 = vsel %vm341, %v384, %v388
      %v391 = vshrl.u32 %v313, 16
      %v393 = vshll.u32 %v313, 16
      %v395 = vrot.slane %v393, 1
      %v396 = vor.u32 %v391, %v395
      %v398 = vshll.u32 %v337, 16
      %v400 = vrot.slane %v398, 1
      %v401 = vsel %vm341, %v396, %v400
      %v403 = vshrl.u32 %v314, 16
      %v405 = vshll.u32 %v314, 16
      %v407 = vrot.slane %v405, 1
      %v408 = vor.u32 %v403, %v407
      %v410 = vshll.u32 %v338, 16
      %v412 = vrot.slane %v410, 1
      %v413 = vsel %vm341, %v408, %v412
      %v415 = vshrl.u32 %v315, 16
      %v417 = vshll.u32 %v315, 16
      %v419 = vrot.slane %v417, 1
      %v420 = vor.u32 %v415, %v419
      %v422 = vshll.u32 %v339, 16
      %v424 = vrot.slane %v422, 1
      %v425 = vsel %vm341, %v420, %v424
      %v427 = vshrl.u32 %v316, 16
      %v429 = vshll.u32 %v316, 16
      %v431 = vrot.slane %v429, 1
      %v432 = vor.u32 %v427, %v431
      %v434 = vshll.u32 %v340, 16
      %v436 = vrot.slane %v434, 1
      %v437 = vsel %vm341, %v432, %v436
      %438 = vrot.lane.b32.xlu0 %v353, 4
      %v439 = vpop.permute.xlu0 %438
      %440 = vrot.lane.b32.xlu0 %v365, 4
      %v441 = vpop.permute.xlu0 %440
      %442 = vrot.lane.b32.xlu0 %v377, 4
      %v443 = vpop.permute.xlu0 %442
      %444 = vrot.lane.b32.xlu0 %v389, 4
      %v445 = vpop.permute.xlu0 %444
      %446 = vrot.lane.b32.xlu0 %v401, 4
      %v447 = vpop.permute.xlu0 %446
      %448 = vrot.lane.b32.xlu0 %v413, 4
      %v449 = vpop.permute.xlu0 %448
      %450 = vrot.lane.b32.xlu0 %v425, 4
      %v451 = vpop.permute.xlu0 %450
      %452 = vrot.lane.b32.xlu0 %v437, 4
      %v453 = vpop.permute.xlu0 %452
      %vm454 = vcmask 1046528
      %v455 = vrot.slane %v309, 1
      %v456 = vrot.slane %v333, 1
      %v457 = vsel %vm454, %v455, %v456
      %v458 = vrot.slane %v310, 1
      %v459 = vrot.slane %v334, 1
      %v460 = vsel %vm454, %v458, %v459
      %v461 = vrot.slane %v311, 1
      %v462 = vrot.slane %v335, 1
      %v463 = vsel %vm454, %v461, %v462
      %v464 = vrot.slane %v312, 1
      %v465 = vrot.slane %v336, 1
      %v466 = vsel %vm454, %v464, %v465
      %v467 = vrot.slane %v313, 1
      %v468 = vrot.slane %v337, 1
      %v469 = vsel %vm454, %v467, %v468
      %v470 = vrot.slane %v314, 1
      %v471 = vrot.slane %v338, 1
      %v472 = vsel %vm454, %v470, %v471
      %v473 = vrot.slane %v315, 1
      %v474 = vrot.slane %v339, 1
      %v475 = vsel %vm454, %v473, %v474
      %v476 = vrot.slane %v316, 1
      %v477 = vrot.slane %v340, 1
      %v478 = vsel %vm454, %v476, %v477
      %479 = vrot.lane.b32.xlu0 %v457, 8
      %v480 = vpop.permute.xlu0 %479
      %481 = vrot.lane.b32.xlu0 %v460, 8
      %v482 = vpop.permute.xlu0 %481
      %483 = vrot.lane.b32.xlu0 %v463, 8
      %v484 = vpop.permute.xlu0 %483
      %485 = vrot.lane.b32.xlu0 %v466, 8
      %v486 = vpop.permute.xlu0 %485
      %487 = vrot.lane.b32.xlu0 %v469, 8
      %v488 = vpop.permute.xlu0 %487
      %489 = vrot.lane.b32.xlu0 %v472, 8
      %v490 = vpop.permute.xlu0 %489
      %491 = vrot.lane.b32.xlu0 %v475, 8
      %v492 = vpop.permute.xlu0 %491
      %493 = vrot.lane.b32.xlu0 %v478, 8
      %v494 = vpop.permute.xlu0 %493
      %v497 = vunpack.c.l.b16 %v271
      %v498 = vunpack.c.l.b16 %v272
      %v499 = vpack.c.b16 %v498, %v497
      %500 = vrot.lane.b32.xlu0 %v310, 12
      %v501 = vpop.permute.xlu0 %500
      %502 = vrot.lane.b32.xlu0 %v311, 12
      %v503 = vpop.permute.xlu0 %502
      %504 = vrot.lane.b32.xlu0 %v312, 12
      %v505 = vpop.permute.xlu0 %504
      %506 = vrot.lane.b32.xlu0 %v313, 12
      %v507 = vpop.permute.xlu0 %506
      %508 = vrot.lane.b32.xlu0 %v314, 12
      %v509 = vpop.permute.xlu0 %508
      %510 = vrot.lane.b32.xlu0 %v315, 12
      %v511 = vpop.permute.xlu0 %510
      %512 = vrot.lane.b32.xlu0 %v316, 12
      %v513 = vpop.permute.xlu0 %512
      %514 = vrot.lane.b32.xlu0 %v499, 12
      %v515 = vpop.permute.xlu0 %514
      %v517 = vunpack.c.l.b16 %v273
      %v518 = vpack.c.b16 %v517, %v517
      %v520 = vshrl.u32 %v499, 16
      %v522 = vshll.u32 %v499, 16
      %v524 = vrot.slane %v522, 1
      %v525 = vor.u32 %v520, %v524
      %v527 = vshll.u32 %v518, 16
      %v529 = vrot.slane %v527, 1
      %v530 = vsel %vm341, %v525, %v529
      %531 = vrot.lane.b32.xlu0 %v365, 16
      %v532 = vpop.permute.xlu0 %531
      %533 = vrot.lane.b32.xlu0 %v377, 16
      %v534 = vpop.permute.xlu0 %533
      %535 = vrot.lane.b32.xlu0 %v389, 16
      %v536 = vpop.permute.xlu0 %535
      %537 = vrot.lane.b32.xlu0 %v401, 16
      %v538 = vpop.permute.xlu0 %537
      %539 = vrot.lane.b32.xlu0 %v413, 16
      %v540 = vpop.permute.xlu0 %539
      %541 = vrot.lane.b32.xlu0 %v425, 16
      %v542 = vpop.permute.xlu0 %541
      %543 = vrot.lane.b32.xlu0 %v437, 16
      %v544 = vpop.permute.xlu0 %543
      %545 = vrot.lane.b32.xlu0 %v530, 16
      %v546 = vpop.permute.xlu0 %545
      %v547 = vrot.slane %v499, 1
      %v548 = vrot.slane %v518, 1
      %v549 = vsel %vm454, %v547, %v548
      %550 = vrot.lane.b32.xlu0 %v460, 20
      %v551 = vpop.permute.xlu0 %550
      %552 = vrot.lane.b32.xlu0 %v463, 20
      %v553 = vpop.permute.xlu0 %552
      %554 = vrot.lane.b32.xlu0 %v466, 20
      %v555 = vpop.permute.xlu0 %554
      %556 = vrot.lane.b32.xlu0 %v469, 20
      %v557 = vpop.permute.xlu0 %556
      %558 = vrot.lane.b32.xlu0 %v472, 20
      %v559 = vpop.permute.xlu0 %558
      %560 = vrot.lane.b32.xlu0 %v475, 20
      %v561 = vpop.permute.xlu0 %560
      %562 = vrot.lane.b32.xlu0 %v478, 20
      %v563 = vpop.permute.xlu0 %562
      %564 = vrot.lane.b32.xlu0 %v549, 20
      %v565 = vpop.permute.xlu0 %564
      %v568 = vunpack.c.l.b16 %v274
      %v569 = vunpack.c.l.b16 %v275
      %v570 = vpack.c.b16 %v569, %v568
      %571 = vrot.lane.b32.xlu0 %v311, 24
      %v572 = vpop.permute.xlu0 %571
      %573 = vrot.lane.b32.xlu0 %v312, 24
      %v574 = vpop.permute.xlu0 %573
      %575 = vrot.lane.b32.xlu0 %v313, 24
      %v576 = vpop.permute.xlu0 %575
      %577 = vrot.lane.b32.xlu0 %v314, 24
      %v578 = vpop.permute.xlu0 %577
      %579 = vrot.lane.b32.xlu0 %v315, 24
      %v580 = vpop.permute.xlu0 %579
      %581 = vrot.lane.b32.xlu0 %v316, 24
      %v582 = vpop.permute.xlu0 %581
      %583 = vrot.lane.b32.xlu0 %v499, 24
      %v584 = vpop.permute.xlu0 %583
      %585 = vrot.lane.b32.xlu0 %v570, 24
      %v586 = vpop.permute.xlu0 %585
      %v588 = vunpack.c.l.b16 %v276
      %v589 = vpack.c.b16 %v588, %v588
      %v591 = vshrl.u32 %v570, 16
      %v593 = vshll.u32 %v570, 16
      %v595 = vrot.slane %v593, 1
      %v596 = vor.u32 %v591, %v595
      %v598 = vshll.u32 %v589, 16
      %v600 = vrot.slane %v598, 1
      %v601 = vsel %vm341, %v596, %v600
      %602 = vrot.lane.b32.xlu0 %v377, 28
      %v603 = vpop.permute.xlu0 %602
      %604 = vrot.lane.b32.xlu0 %v389, 28
      %v605 = vpop.permute.xlu0 %604
      %606 = vrot.lane.b32.xlu0 %v401, 28
      %v607 = vpop.permute.xlu0 %606
      %608 = vrot.lane.b32.xlu0 %v413, 28
      %v609 = vpop.permute.xlu0 %608
      %610 = vrot.lane.b32.xlu0 %v425, 28
      %v611 = vpop.permute.xlu0 %610
      %612 = vrot.lane.b32.xlu0 %v437, 28
      %v613 = vpop.permute.xlu0 %612
      %614 = vrot.lane.b32.xlu0 %v530, 28
      %v615 = vpop.permute.xlu0 %614
      %616 = vrot.lane.b32.xlu0 %v601, 28
      %v617 = vpop.permute.xlu0 %616
      %v618 = vrot.slane %v570, 1
      %v619 = vrot.slane %v589, 1
      %v620 = vsel %vm454, %v618, %v619
      %621 = vrot.lane.b32.xlu0 %v463, 32
      %v622 = vpop.permute.xlu0 %621
      %623 = vrot.lane.b32.xlu0 %v466, 32
      %v624 = vpop.permute.xlu0 %623
      %625 = vrot.lane.b32.xlu0 %v469, 32
      %v626 = vpop.permute.xlu0 %625
      %627 = vrot.lane.b32.xlu0 %v472, 32
      %v628 = vpop.permute.xlu0 %627
      %629 = vrot.lane.b32.xlu0 %v475, 32
      %v630 = vpop.permute.xlu0 %629
      %631 = vrot.lane.b32.xlu0 %v478, 32
      %v632 = vpop.permute.xlu0 %631
      %633 = vrot.lane.b32.xlu0 %v549, 32
      %v634 = vpop.permute.xlu0 %633
      %635 = vrot.lane.b32.xlu0 %v620, 32
      %v636 = vpop.permute.xlu0 %635
      %vm637 = vcmask 31744
      %v639 = vsel %vm637, %v309, %v439
      %v641 = vsel %vm637, %v310, %v441
      %v643 = vsel %vm637, %v311, %v443
      %v645 = vsel %vm637, %v312, %v445
      %v647 = vsel %vm637, %v313, %v447
      %v649 = vsel %vm637, %v314, %v449
      %v651 = vsel %vm637, %v315, %v451
      %v653 = vsel %vm637, %v316, %v453
      %vm654 = vcmask 64512
      %v656 = vsel %vm654, %v639, %v480
      %v658 = vsel %vm654, %v641, %v482
      %v660 = vsel %vm654, %v643, %v484
      %v662 = vsel %vm654, %v645, %v486
      %v664 = vsel %vm654, %v647, %v488
      %v666 = vsel %vm654, %v649, %v490
      %v668 = vsel %vm654, %v651, %v492
      %v670 = vsel %vm654, %v653, %v494
      %vm671 = vcmask 97280
      %v673 = vsel %vm671, %v656, %v501
      %v675 = vsel %vm671, %v658, %v503
      %v677 = vsel %vm671, %v660, %v505
      %v679 = vsel %vm671, %v662, %v507
      %v681 = vsel %vm671, %v664, %v509
      %v683 = vsel %vm671, %v666, %v511
      %v685 = vsel %vm671, %v668, %v513
      %v687 = vsel %vm671, %v670, %v515
      %vm688 = vcmask 130048
      %v690 = vsel %vm688, %v673, %v532
      %v692 = vsel %vm688, %v675, %v534
      %v694 = vsel %vm688, %v677, %v536
      %v696 = vsel %vm688, %v679, %v538
      %v698 = vsel %vm688, %v681, %v540
      %v700 = vsel %vm688, %v683, %v542
      %v702 = vsel %vm688, %v685, %v544
      %v704 = vsel %vm688, %v687, %v546
      %vm705 = vcmask 162816
      %v707 = vsel %vm705, %v690, %v551
      %v709 = vsel %vm705, %v692, %v553
      %v711 = vsel %vm705, %v694, %v555
      %v713 = vsel %vm705, %v696, %v557
      %v715 = vsel %vm705, %v698, %v559
      %v717 = vsel %vm705, %v700, %v561
      %v719 = vsel %vm705, %v702, %v563
      %v721 = vsel %vm705, %v704, %v565
      %vm722 = vcmask 195584
      %v724 = vsel %vm722, %v707, %v572
      %v726 = vsel %vm722, %v709, %v574
      %v728 = vsel %vm722, %v711, %v576
      %v730 = vsel %vm722, %v713, %v578
      %v732 = vsel %vm722, %v715, %v580
      %v734 = vsel %vm722, %v717, %v582
      %v736 = vsel %vm722, %v719, %v584
      %v738 = vsel %vm722, %v721, %v586
      %vm739 = vcmask 228352
      %v741 = vsel %vm739, %v724, %v603
      %v743 = vsel %vm739, %v726, %v605
      %v745 = vsel %vm739, %v728, %v607
      %v747 = vsel %vm739, %v730, %v609
      %v749 = vsel %vm739, %v732, %v611
      %v751 = vsel %vm739, %v734, %v613
      %v753 = vsel %vm739, %v736, %v615
      %v755 = vsel %vm739, %v738, %v617
      %vm756 = vcmask 261120
      %v758 = vsel %vm756, %v741, %v622
      %v760 = vsel %vm756, %v743, %v624
      %v762 = vsel %vm756, %v745, %v626
      %v764 = vsel %vm756, %v747, %v628
      %v766 = vsel %vm756, %v749, %v630
      %v768 = vsel %vm756, %v751, %v632
      %v770 = vsel %vm756, %v753, %v634
      %v772 = vsel %vm756, %v755, %v636
      %v773 = vld [vmem:[%s224] sm:$0xf]
      %v774 = vld [vmem:[%s224 + $0x4] sm:$0xf]
      %v775 = vld [vmem:[%s224 + $0x8] sm:$0xf]
      %v776 = vld [vmem:[%s224 + $0xc] sm:$0xf]
      %v777 = vld [vmem:[%s224 + $0x10] sm:$0x3]
      %v778 = vld [vmem:[%s227] sm:$0x1]
      %v780 = vlaneseq
      %v781 = vshrl.u32 %v780, 7
      %v782 = vsub.s32 0, %v781
      %v783 = vrot.slane %v778, %v782
      %v790 = vunpack.c.l.b16 %v773
      %v791 = vunpack.c.l.b16 %v774
      %v792 = vunpack.c.l.b16 %v775
      %v793 = vunpack.c.l.b16 %v776
      %v794 = vunpack.c.l.b16 %v777
      %v795 = vpack.c.b16 %v791, %v790
      %v796 = vpack.c.b16 %v793, %v792
      %v797 = vpack.c.b16 %v794, %v794
      %vm800 = vcmask 293888
      %v801 = vsel %vm800, %v758, 0
      %v803 = vsel %vm800, %v760, 0
      %v805 = vsel %vm800, %v762, 0
      %v807 = vsel %vm800, %v764, 0
      %v809 = vsel %vm800, %v766, 0
      %v811 = vsel %vm800, %v768, 0
      %v813 = vsel %vm800, %v770, 0
      %v815 = vsel %vm800, %v772, 0
      %vm817 = vcmask 1041408
      %v819 = vsel %vm817, %v797, 0
      %821 = vmatprep.subr.bf16.mxu0 0
      %822 = vmatpush1.bf16.msra.mxu0 %v795
      %823 = vmatprep.subr.bf16.mxu0 0
      %824 = vmatpush1.bf16.msra.mxu0 %v796
      %825 = vmatprep.subr.bf16.mxu0 0
      %826 = vmatpush1.bf16.msra.mxu0 %v819
      %827 = vmatprep.subr.bf16.mxu0 0
      %828 = vmatpush1.bf16.msra.mxu0 0
      %829 = vmatprep.subr.bf16.mxu0 0
      %830 = vmatpush1.bf16.msra.mxu0 0
      %831 = vmatprep.subr.bf16.mxu0 0
      %832 = vmatpush1.bf16.msra.mxu0 0
      %833 = vmatprep.subr.bf16.mxu0 0
      %834 = vmatpush1.bf16.msra.mxu0 0
      %835 = vmatprep.subr.bf16.mxu0 0
      %836 = vmatpush1.bf16.msra.mxu0 0
      %837 = vmatprep.subr.bf16.mxu0 0
      %838 = vmatpush1.bf16.msra.mxu0 0
      %839 = vmatprep.subr.bf16.mxu0 0
      %840 = vmatpush1.bf16.msra.mxu0 0
      %841 = vmatprep.subr.bf16.mxu0 0
      %842 = vmatpush1.bf16.msra.mxu0 0
      %843 = vmatprep.subr.bf16.mxu0 0
      %844 = vmatpush1.bf16.msra.mxu0 0
      %845 = vmatprep.subr.bf16.mxu0 0
      %846 = vmatpush1.bf16.msra.mxu0 0
      %847 = vmatprep.subr.bf16.mxu0 0
      %848 = vmatpush1.bf16.msra.mxu0 0
      %849 = vmatprep.subr.bf16.mxu0 0
      %850 = vmatpush1.bf16.msra.mxu0 0
      %851 = vmatprep.subr.bf16.mxu0 0
      %852 = vmatpush1.bf16.msra.mxu0 0
      %853 = vmatprep.mubr.bf16.mxu0 0
      %854 = vmatmul.mubr.bf16.gmra.mrb[0].mxu0 %v801
      %v855 = vpop.f32.mrb[0].mxu0
      %v856 = vadd.f32 %v783, %v855
      %v857 = vpop.f32.mrb[0].mxu0
      %v858 = vpop.f32.mrb[0].mxu0
      %v859 = vadd.f32 %v783, %v858
      %v860 = vpop.f32.mrb[0].mxu0
      %861 = vmatprep.mubr.bf16.mxu0 0
      %862 = vmatmul.mubr.bf16.gmra.mrb[0].mxu0 %v803
      %v863 = vpop.f32.mrb[0].mxu0
      %v864 = vadd.f32 %v783, %v863
      %v865 = vpop.f32.mrb[0].mxu0
      %v866 = vpop.f32.mrb[0].mxu0
      %v867 = vadd.f32 %v783, %v866
      %v868 = vpop.f32.mrb[0].mxu0
      %869 = vmatprep.mubr.bf16.mxu0 0
      %870 = vmatmul.mubr.bf16.gmra.mrb[0].mxu0 %v805
      %v871 = vpop.f32.mrb[0].mxu0
      %v872 = vadd.f32 %v783, %v871
      %v873 = vpop.f32.mrb[0].mxu0
      %v874 = vpop.f32.mrb[0].mxu0
      %v875 = vadd.f32 %v783, %v874
      %v876 = vpop.f32.mrb[0].mxu0
      %877 = vmatprep.mubr.bf16.mxu0 0
      %878 = vmatmul.mubr.bf16.gmra.mrb[0].mxu0 %v807
      %v879 = vpop.f32.mrb[0].mxu0
      %v880 = vadd.f32 %v783, %v879
      %v881 = vpop.f32.mrb[0].mxu0
      %v882 = vpop.f32.mrb[0].mxu0
      %v883 = vadd.f32 %v783, %v882
      %v884 = vpop.f32.mrb[0].mxu0
      %885 = vmatprep.mubr.bf16.mxu0 0
      %886 = vmatmul.mubr.bf16.gmra.mrb[0].mxu0 %v809
      %v887 = vpop.f32.mrb[0].mxu0
      %v888 = vadd.f32 %v783, %v887
      %v889 = vpop.f32.mrb[0].mxu0
      %v890 = vpop.f32.mrb[0].mxu0
      %v891 = vadd.f32 %v783, %v890
      %v892 = vpop.f32.mrb[0].mxu0
      %893 = vmatprep.mubr.bf16.mxu0 0
      %894 = vmatmul.mubr.bf16.gmra.mrb[0].mxu0 %v811
      %v895 = vpop.f32.mrb[0].mxu0
      %v896 = vadd.f32 %v783, %v895
      %v897 = vpop.f32.mrb[0].mxu0
      %v898 = vpop.f32.mrb[0].mxu0
      %v899 = vadd.f32 %v783, %v898
      %v900 = vpop.f32.mrb[0].mxu0
      %901 = vmatprep.mubr.bf16.mxu0 0
      %902 = vmatmul.mubr.bf16.gmra.mrb[0].mxu0 %v813
      %v903 = vpop.f32.mrb[0].mxu0
      %v904 = vadd.f32 %v783, %v903
      %v905 = vpop.f32.mrb[0].mxu0
      %v906 = vpop.f32.mrb[0].mxu0
      %v907 = vadd.f32 %v783, %v906
      %v908 = vpop.f32.mrb[0].mxu0
      %909 = vmatprep.mubr.bf16.mxu0 0
      %910 = vmatmul.mubr.bf16.gmra.mrb[0].mxu0 %v815
      %v911 = vpop.f32.mrb[0].mxu0
      %v912 = vadd.f32 %v783, %v911
      %v913 = vpop.f32.mrb[0].mxu0
      %v914 = vpop.f32.mrb[0].mxu0
      %v915 = vadd.f32 %v783, %v914
      %v916 = vpop.f32.mrb[0].mxu0
      %917 = vdwg.mxu0
      %v918 = vxor.u32 %v856, 2147483648
      %v919 = vxor.u32 %v859, 2147483648
      %v920 = vxor.u32 %v864, 2147483648
      %v921 = vxor.u32 %v867, 2147483648
      %v922 = vxor.u32 %v872, 2147483648
      %v923 = vxor.u32 %v875, 2147483648
      %v924 = vxor.u32 %v880, 2147483648
      %v925 = vxor.u32 %v883, 2147483648
      %v926 = vxor.u32 %v888, 2147483648
      %v927 = vxor.u32 %v891, 2147483648
      %v928 = vxor.u32 %v896, 2147483648
      %v929 = vxor.u32 %v899, 2147483648
      %v930 = vxor.u32 %v904, 2147483648
      %v931 = vxor.u32 %v907, 2147483648
      %v932 = vxor.u32 %v912, 2147483648
      %v933 = vxor.u32 %v915, 2147483648
      %v934 = vmul.f32 %v918, 1.442695
      %v935 = vpow.pop %v934
      %v936 = vmul.f32 %v919, 1.442695
      %v937 = vpow.pop %v936
      %v938 = vmul.f32 %v920, 1.442695
      %v939 = vpow.pop %v938
      %v940 = vmul.f32 %v921, 1.442695
      %v941 = vpow.pop %v940
      %v942 = vmul.f32 %v922, 1.442695
      %v943 = vpow.pop %v942
      %v944 = vmul.f32 %v923, 1.442695
      %v945 = vpow.pop %v944
      %v946 = vmul.f32 %v924, 1.442695
      %v947 = vpow.pop %v946
      %v948 = vmul.f32 %v925, 1.442695
      %v949 = vpow.pop %v948
      %v950 = vmul.f32 %v926, 1.442695
      %v951 = vpow.pop %v950
      %v952 = vmul.f32 %v927, 1.442695
      %v953 = vpow.pop %v952
      %v954 = vmul.f32 %v928, 1.442695
      %v955 = vpow.pop %v954
      %v956 = vmul.f32 %v929, 1.442695
      %v957 = vpow.pop %v956
      %v958 = vmul.f32 %v930, 1.442695
      %v959 = vpow.pop %v958
      %v960 = vmul.f32 %v931, 1.442695
      %v961 = vpow.pop %v960
      %v962 = vmul.f32 %v932, 1.442695
      %v963 = vpow.pop %v962
      %v964 = vmul.f32 %v933, 1.442695
      %v965 = vpow.pop %v964
      %v966 = vadd.f32 %v935, 1.0
      %v967 = vadd.f32 %v937, 1.0
      %v968 = vadd.f32 %v939, 1.0
      %v969 = vadd.f32 %v941, 1.0
      %v970 = vadd.f32 %v943, 1.0
      %v971 = vadd.f32 %v945, 1.0
      %v972 = vadd.f32 %v947, 1.0
      %v973 = vadd.f32 %v949, 1.0
      %v974 = vadd.f32 %v951, 1.0
      %v975 = vadd.f32 %v953, 1.0
      %v976 = vadd.f32 %v955, 1.0
      %v977 = vadd.f32 %v957, 1.0
      %v978 = vadd.f32 %v959, 1.0
      %v979 = vadd.f32 %v961, 1.0
      %v980 = vadd.f32 %v963, 1.0
      %v981 = vadd.f32 %v965, 1.0
      %v982 = vrcp.pop %v966
      %v983 = vmul.f32 1.0, %v982
      %v984 = vrcp.pop %v967
      %v985 = vmul.f32 1.0, %v984
      %v986 = vrcp.pop %v968
      %v987 = vmul.f32 1.0, %v986
      %v988 = vrcp.pop %v969
      %v989 = vmul.f32 1.0, %v988
      %v990 = vrcp.pop %v970
      %v991 = vmul.f32 1.0, %v990
      %v992 = vrcp.pop %v971
      %v993 = vmul.f32 1.0, %v992
      %v994 = vrcp.pop %v972
      %v995 = vmul.f32 1.0, %v994
      %v996 = vrcp.pop %v973
      %v997 = vmul.f32 1.0, %v996
      %v998 = vrcp.pop %v974
      %v999 = vmul.f32 1.0, %v998
      %v1000 = vrcp.pop %v975
      %v1001 = vmul.f32 1.0, %v1000
      %v1002 = vrcp.pop %v976
      %v1003 = vmul.f32 1.0, %v1002
      %v1004 = vrcp.pop %v977
      %v1005 = vmul.f32 1.0, %v1004
      %v1006 = vrcp.pop %v978
      %v1007 = vmul.f32 1.0, %v1006
      %v1008 = vrcp.pop %v979
      %v1009 = vmul.f32 1.0, %v1008
      %v1010 = vrcp.pop %v980
      %v1011 = vmul.f32 1.0, %v1010
      %v1012 = vrcp.pop %v981
      %v1013 = vmul.f32 1.0, %v1012
      %v1014 = vmul.f32 %v856, %v983
      %v1015 = vmul.f32 %v859, %v985
      %v1016 = vmul.f32 %v864, %v987
      %v1017 = vmul.f32 %v867, %v989
      %v1018 = vmul.f32 %v872, %v991
      %v1019 = vmul.f32 %v875, %v993
      %v1020 = vmul.f32 %v880, %v995
      %v1021 = vmul.f32 %v883, %v997
      %v1022 = vmul.f32 %v888, %v999
      %v1023 = vmul.f32 %v891, %v1001
      %v1024 = vmul.f32 %v896, %v1003
      %v1025 = vmul.f32 %v899, %v1005
      %v1026 = vmul.f32 %v904, %v1007
      %v1027 = vmul.f32 %v907, %v1009
      %v1028 = vmul.f32 %v912, %v1011
      %v1029 = vmul.f32 %v915, %v1013
      %1030 = vst.msk [vmem:[%s240] sm:$0xff] %vm654, %v1014
      %1031 = vst.msk [vmem:[%s240 + $0x8] sm:$0xff] %vm654, %v1015
      %1032 = vst.msk [vmem:[%s240 + $0x10] sm:$0xff] %vm654, %v1016
      %1033 = vst.msk [vmem:[%s240 + $0x18] sm:$0xff] %vm654, %v1017
      %1034 = vst.msk [vmem:[%s240 + $0x20] sm:$0xff] %vm654, %v1018
      %1035 = vst.msk [vmem:[%s240 + $0x28] sm:$0xff] %vm654, %v1019
      %1036 = vst.msk [vmem:[%s240 + $0x30] sm:$0xff] %vm654, %v1020
      %1037 = vst.msk [vmem:[%s240 + $0x38] sm:$0xff] %vm654, %v1021
      %1038 = vst.msk [vmem:[%s240 + $0x40] sm:$0xff] %vm654, %v1022
      %1039 = vst.msk [vmem:[%s240 + $0x48] sm:$0xff] %vm654, %v1023
      %1040 = vst.msk [vmem:[%s240 + $0x50] sm:$0xff] %vm654, %v1024
      %1041 = vst.msk [vmem:[%s240 + $0x58] sm:$0xff] %vm654, %v1025
      %1042 = vst.msk [vmem:[%s240 + $0x60] sm:$0xff] %vm654, %v1026
      %1043 = vst.msk [vmem:[%s240 + $0x68] sm:$0xff] %vm654, %v1027
      %1044 = vst.msk [vmem:[%s240 + $0x70] sm:$0xff] %vm654, %v1028
      %1045 = vst.msk [vmem:[%s240 + $0x78] sm:$0xff] %vm654, %v1029
      %s1046 = smul.u32 8, %s20
      %p1047 = scmp.lt.s32.totalorder %s19, 1
      %s1048 = scalar_select %p1047, %s19, 1
      %p1049 = scmp.lt.s32.totalorder %s1046, 15
      %s1050 = scalar_select %p1049, %s1046, 15
      %p1051 = scmp.lt.s32.totalorder %s21, 0
      %s1052 = scalar_select %p1051, %s21, 0
      %s1053 = smul.addr %s1050, 2
      %s1054 = sadd.s32 %s1052, %s1053
      %s1055 = smul.addr %s1048, 32
      %s1056 = sadd.s32 %s1054, %s1055
      %s1057 = smul.addr %s1056, 8
      %s1058 = scalar_lea.vmem %s3, %s1057
      // Predicated region
      $region33: #{_conv_bn_silu_impl.1} parent=31 // pred_check
        %p1059 = pneg %p133
      $region34: #{_conv_bn_silu_impl.1} parent=31 // pred_check_branch
        %1061 = sbr.rel (%p1059) target = $region36
      $region35: #{_conv_bn_silu_impl.1} parent=31 // pred_region
        %s1062 = smul.u32 8, %s20
      $region36: #{_conv_bn_silu_impl.1} parent=31 // pred_fallthru
        _
    $region32: #{_conv_bn_silu_impl.1} parent=5 // pred_fallthru
      _
    %p1063 = scmp.le.s32.totalorder 2, %s9
    // Predicated region
    $region37: #{_conv_bn_silu_impl.1} parent=5 // pred_check
      %p1064 = pneg %p1063
    $region38: #{_conv_bn_silu_impl.1} parent=5 // pred_check_branch
      %1066 = sbr.rel (%p1064) target = $region40
    $region39: #{_conv_bn_silu_impl.1} parent=5 // pred_region
      %s1067 = ssub.s32 %s9, 2
      // Predicated region
      $region41: #{_conv_bn_silu_impl.1} parent=39 // pred_check
        %p1068 = pneg %p139
      $region42: #{_conv_bn_silu_impl.1} parent=39 // pred_check_branch
        %1070 = sbr.rel (%p1068) target = $region44
      $region43: #{_conv_bn_silu_impl.1} parent=39 // pred_region
        %s1071 = smul.u32 8, %s23
        %p1072 = scmp.lt.s32.totalorder %s22, 1
        %s1073 = scalar_select %p1072, %s22, 1
        %p1074 = scmp.lt.s32.totalorder %s1071, 15
        %s1075 = scalar_select %p1074, %s1071, 15
        %p1076 = scmp.lt.s32.totalorder %s24, 0
        %s1077 = scalar_select %p1076, %s24, 0
        %s1078 = smul.addr %s1075, 2
        %s1079 = sadd.s32 %s1077, %s1078
        %s1080 = smul.addr %s1073, 32
        %s1081 = sadd.s32 %s1079, %s1080
        %s1082 = smul.addr %s1081, 8
        %s1083 = scalar_lea.vmem %s3, %s1082
      $region44: #{_conv_bn_silu_impl.1} parent=39 // pred_fallthru
        _
    $region40: #{_conv_bn_silu_impl.1} parent=5 // pred_fallthru
      _
  $region6: #{_conv_bn_silu_impl.1} parent=0 // loop_footer
    %s13 = sadd.s32 1, %s9
  $region7: #{_conv_bn_silu_impl.1} parent=0 // loop_footer_branch
    %8 = sbr.rel target = $region3
  $region8: #{_conv_bn_silu_impl.1} parent=0 // loop_exit
    _

// kernel: _conv_bn_silu_impl.1
$region0: #{_conv_bn_silu_impl.1}
  #allocation0 [shape = 'u32[]', space=smem, size = 0x4, offset = 0x4, fixed_abs, tag = 'smem constant byte address 0x4 - core index']
  #allocation1 [shape = 'u32[144,128]{1,0:T(1,128)}', space=vmem, size = 0x12000, scoped, tag = 'internal scratch']
  %s0 = inlined_call_operand.vmem [shape: bf16[2,18,18,4], index: 0, kind: input, shape index: {}]
  %s1 = inlined_call_operand.vmem [shape: bf16[36,8], index: 1, kind: input, shape index: {}]
  %s2 = inlined_call_operand.vmem [shape: f32[1,8], index: 2, kind: input, shape index: {}]
  %s3 = inlined_call_operand.vmem [shape: f32[2,16,16,8], index: 3, kind: output, shape index: {}]
  %s4 = sld [smem:[#allocation0]]
  $region45: #{_conv_bn_silu_impl.1} parent=0
    _
  %s6 = ssub.s32 1, %s4
  %s7 = scalar_select 0, %s6, %s4
  loop: start=0, step=1, limit=6
  $region2: #{_conv_bn_silu_impl.1} parent=0 // loop_pre_header
    _
  $region3: #{_conv_bn_silu_impl.1} parent=0 // loop_header
    %s9 = sphi 0, %s13
    %p10 = scmp.ge.s32.totalorder %s9, 6
    %s16 = sphi 0, %s35
    %s17 = sphi 0, %s31
    %s18 = sphi 0, %s27
    %s19 = sphi 0, %s16
    %s20 = sphi 0, %s17
    %s21 = sphi 0, %s18
    %s22 = sphi 0, %s19
    %s23 = sphi 0, %s20
    %s24 = sphi 0, %s21
    %s38 = sphi 0, %s40
    %s41 = sphi 0, %s38
    %s42 = sphi 0, %s41
    %s58 = sphi 0, %s42
    %s64 = sphi 0, %s66
    %s67 = sphi 0, %s64
    %s68 = sphi 0, %s67
    %s84 = sphi 0, %s68
    %s90 = sphi 0, %s92
    %s93 = sphi 0, %s90
    %s94 = sphi 0, %s93
    %s110 = sphi 0, %s94
    %s120 = sphi 0, %s122
    %s123 = sphi 0, %s120
    %s124 = sphi 0, %s123
    %s140 = sphi 0, %s124
  $region4: #{_conv_bn_silu_impl.1} parent=0 // loop_header_branch
    %12 = sbr.rel (%p10) target = $region8
  $region5: #{_conv_bn_silu_impl.1} parent=0 // loop_body
    %s14 = ssub.s32 %s9, 1
    %s15 = ssub.s32 %s9, 2
    %s25 = sadd.s32 1, %s18
    %p26 = scmp.ge.s32.totalorder %s25, 1
    %s27 = scalar_select %p26, 0, %s25
    %s28 = sadd.s32 1, %s17
    %s29 = scalar_select %p26, %s28, %s17
    %p30 = scmp.ge.s32.totalorder %s29, 2
    %s31 = scalar_select %p30, 0, %s29
    %s32 = sadd.s32 1, %s16
    %s33 = scalar_select %p30, %s32, %s16
    %p34 = scmp.ge.s32.totalorder %s33, 2
    %s35 = scalar_select %p34, 0, %s33
    %s36 = ssub.s32 %s16, %s35
    %p37 = scmp.eq.s32.totalorder %s36, 0
    %s39 = sadd.s32 %s38, 1
    %s40 = scalar_select %p37, %s38, %s39
    %p43 = pneg %p37
    %p44 = scmp.eq.s32.totalorder %s9, 3
    %p45 = por %p43, %p44
    %p46 = scmp.ne.s32.totalorder %s38, %s41
    %p47 = scmp.eq.s32.totalorder %s9, 0
    %p48 = por %p46, %p47
    %p49 = scmp.ne.s32.totalorder %s38, %s41
    %p50 = scmp.eq.s32.totalorder %s14, 3
    %p51 = por %p49, %p50
    %p52 = scmp.ne.s32.totalorder %s41, %s42
    %p53 = scmp.eq.s32.totalorder %s14, 0
    %p54 = por %p52, %p53
    %p55 = scmp.ne.s32.totalorder %s41, %s42
    %p56 = scmp.eq.s32.totalorder %s15, 3
    %p57 = por %p55, %p56
    %p59 = scmp.ne.s32.totalorder %s42, %s58
    %p60 = scmp.eq.s32.totalorder %s15, 0
    %p61 = por %p59, %p60
    %s62 = ssub.s32 %s18, %s27
    %p63 = scmp.eq.s32.totalorder %s62, 0
    %s65 = sadd.s32 %s64, 1
    %s66 = scalar_select %p63, %s64, %s65
    %p69 = pneg %p63
    %p70 = scmp.eq.s32.totalorder %s9, 3
    %p71 = por %p69, %p70
    %p72 = scmp.ne.s32.totalorder %s64, %s67
    %p73 = scmp.eq.s32.totalorder %s9, 0
    %p74 = por %p72, %p73
    %p75 = scmp.ne.s32.totalorder %s64, %s67
    %p76 = scmp.eq.s32.totalorder %s14, 3
    %p77 = por %p75, %p76
    %p78 = scmp.ne.s32.totalorder %s67, %s68
    %p79 = scmp.eq.s32.totalorder %s14, 0
    %p80 = por %p78, %p79
    %p81 = scmp.ne.s32.totalorder %s67, %s68
    %p82 = scmp.eq.s32.totalorder %s15, 3
    %p83 = por %p81, %p82
    %p85 = scmp.ne.s32.totalorder %s68, %s84
    %p86 = scmp.eq.s32.totalorder %s15, 0
    %p87 = por %p85, %p86
    %s88 = ssub.s32 %s18, %s27
    %p89 = scmp.eq.s32.totalorder %s88, 0
    %s91 = sadd.s32 %s90, 1
    %s92 = scalar_select %p89, %s90, %s91
    %p95 = pneg %p89
    %p96 = scmp.eq.s32.totalorder %s9, 3
    %p97 = por %p95, %p96
    %p98 = scmp.ne.s32.totalorder %s90, %s93
    %p99 = scmp.eq.s32.totalorder %s9, 0
    %p100 = por %p98, %p99
    %p101 = scmp.ne.s32.totalorder %s90, %s93
    %p102 = scmp.eq.s32.totalorder %s14, 3
    %p103 = por %p101, %p102
    %p104 = scmp.ne.s32.totalorder %s93, %s94
    %p105 = scmp.eq.s32.totalorder %s14, 0
    %p106 = por %p104, %p105
    %p107 = scmp.ne.s32.totalorder %s93, %s94
    %p108 = scmp.eq.s32.totalorder %s15, 3
    %p109 = por %p107, %p108
    %p111 = scmp.ne.s32.totalorder %s94, %s110
    %p112 = scmp.eq.s32.totalorder %s15, 0
    %p113 = por %p111, %p112
    %s114 = ssub.s32 %s16, %s35
    %s115 = ssub.s32 %s17, %s31
    %s116 = sor.u32 %s114, %s115
    %s117 = ssub.s32 %s18, %s27
    %s118 = sor.u32 %s116, %s117
    %p119 = scmp.eq.s32.totalorder %s118, 0
    %s121 = sadd.s32 %s120, 1
    %s122 = scalar_select %p119, %s120, %s121
    %p125 = pneg %p119
    %p126 = scmp.eq.s32.totalorder %s9, 3
    %p127 = por %p125, %p126
    %p128 = scmp.ne.s32.totalorder %s120, %s123
    %p129 = scmp.eq.s32.totalorder %s9, 0
    %p130 = por %p128, %p129
    %p131 = scmp.ne.s32.totalorder %s120, %s123
    %p132 = scmp.eq.s32.totalorder %s14, 3
    %p133 = por %p131, %p132
    %p134 = scmp.ne.s32.totalorder %s123, %s124
    %p135 = scmp.eq.s32.totalorder %s14, 0
    %p136 = por %p134, %p135
    %p137 = scmp.ne.s32.totalorder %s123, %s124
    %p138 = scmp.eq.s32.totalorder %s15, 3
    %p139 = por %p137, %p138
    %p141 = scmp.ne.s32.totalorder %s124, %s140
    %p142 = scmp.eq.s32.totalorder %s15, 0
    %p143 = por %p141, %p142
    %p144 = scmp.le.s32.totalorder 1, %s9
    %p145 = scmp.lt.s32.totalorder %s9, 5
    %p146 = pnand %p144, %p145
    %p147 = pneg %p146
    // Predicated region
    $region9: #{_conv_bn_silu_impl.1} parent=5 // pred_check
      _
    $region10: #{_conv_bn_silu_impl.1} parent=5 // pred_check_branch
      %149 = sbr.rel (%p146) target = $region12
    $region11: #{_conv_bn_silu_impl.1} parent=5 // pred_region
      %s150 = ssub.s32 %s9, 1
      // Predicated region
      $region13: #{_conv_bn_silu_impl.1} parent=11 // pred_check
        %p151 = pneg %p80
      $region14: #{_conv_bn_silu_impl.1} parent=11 // pred_check_branch
        %153 = sbr.rel (%p151) target = $region16
      $region15: #{_conv_bn_silu_impl.1} parent=11 // pred_region
        %p154 = scmp.lt.s32.totalorder %s21, 0
        %s155 = scalar_select %p154, %s21, 0
        %s156 = smul.addr %s155, 4
        %s157 = scalar_lea.vmem %s1, %s156
      $region16: #{_conv_bn_silu_impl.1} parent=11 // pred_fallthru
        _
      // Predicated region
      $region17: #{_conv_bn_silu_impl.1} parent=11 // pred_check
        %p158 = pneg %p106
      $region18: #{_conv_bn_silu_impl.1} parent=11 // pred_check_branch
        %160 = sbr.rel (%p158) target = $region20
      $region19: #{_conv_bn_silu_impl.1} parent=11 // pred_region
        %p161 = scmp.lt.s32.totalorder %s21, 0
        %s162 = scalar_select %p161, %s21, 0
        %s163 = scalar_lea.vmem %s2, %s162
      $region20: #{_conv_bn_silu_impl.1} parent=11 // pred_fallthru
        _
    $region12: #{_conv_bn_silu_impl.1} parent=5 // pred_fallthru
      _
    %p164 = scmp.lt.s32.totalorder %s9, 4
    // Predicated region
    $region21: #{_conv_bn_silu_impl.1} parent=5 // pred_check
      %p165 = pneg %p164
    $region22: #{_conv_bn_silu_impl.1} parent=5 // pred_check_branch
      %167 = sbr.rel (%p165) target = $region24
    $region23: #{_conv_bn_silu_impl.1} parent=5 // pred_region
      // Predicated region
      $region25: #{_conv_bn_silu_impl.1} parent=23 // pred_check
        %p168 = pneg %p48
      $region26: #{_conv_bn_silu_impl.1} parent=23 // pred_check_branch
        %170 = sbr.rel (%p168) target = $region28
      $region27: #{_conv_bn_silu_impl.1} parent=23 // pred_region
        %p171 = scmp.lt.s32.totalorder %s16, 1
        %s172 = scalar_select %p171, %s16, 1
        %s173 = smul.addr %s172, 54
        %s174 = smul.addr %s173, 4
        %s175 = scalar_lea.vmem %s0, %s174
      $region28: #{_conv_bn_silu_impl.1} parent=23 // pred_fallthru
        _
    $region24: #{_conv_bn_silu_impl.1} parent=5 // pred_fallthru
      _
    %p176 = scmp.le.s32.totalorder 1, %s9
    %p177 = scmp.lt.s32.totalorder %s9, 5
    %p178 = pnand %p176, %p177
    %p179 = pneg %p178
    // Predicated region
    $region29: #{_conv_bn_silu_impl.1} parent=5 // pred_check
      _
    $region30: #{_conv_bn_silu_impl.1} parent=5 // pred_check_branch
      %181 = sbr.rel (%p178) target = $region32
    $region31: #{_conv_bn_silu_impl.1} parent=5 // pred_region
      %s182 = ssub.s32 %s9, 1
      %p183 = scmp.lt.s32.totalorder %s19, 1
      %s184 = scalar_select %p183, %s19, 1
      %s185 = smul.addr %s184, 54
      %s186 = smul.addr %s185, 4
      %s187 = scalar_lea.vmem %s0, %s186
      %p188 = pneg %p54
      %p189 = pneg %p51
      %p190 = scmp.lt.s32.totalorder %s21, 0
      %s191 = scalar_select %p190, %s21, 0
      %s192 = smul.addr %s191, 4
      %s193 = scalar_lea.vmem %s1, %s192
      %p194 = pneg %p80
      %p195 = pneg %p77
      %p196 = scmp.lt.s32.totalorder %s21, 0
      %s197 = scalar_select %p196, %s21, 0
      %s198 = scalar_lea.vmem %s2, %s197
      %p199 = pneg %p106
      %p200 = pneg %p103
      %p201 = pneg %p136
      %p202 = pneg %p133
      %s203 = smul.u32 8, %s20
      %p204 = scmp.lt.s32.totalorder %s19, 1
      %s205 = scalar_select %p204, %s19, 1
      %p206 = scmp.lt.s32.totalorder %s203, 15
      %s207 = scalar_select %p206, %s203, 15
      %p208 = scmp.lt.s32.totalorder %s21, 0
      %s209 = scalar_select %p208, %s21, 0
      %s210 = smul.addr %s207, 2
      %s211 = sadd.s32 %s209, %s210
      %s212 = smul.addr %s205, 32
      %s213 = sadd.s32 %s211, %s212
      %s214 = smul.addr %s213, 8
      %s215 = scalar_lea.vmem %s3, %s214
      %p216 = scmp.lt.s32.totalorder %s19, 1
      %s217 = scalar_select %p216, %s19, 1
      %s218 = smul.addr %s217, 54
      %s219 = smul.addr %s218, 4
      %s220 = scalar_lea.vmem %s0, %s219
      %p221 = scmp.lt.s32.totalorder %s21, 0
      %s222 = scalar_select %p221, %s21, 0
      %s223 = smul.addr %s222, 4
      %s224 = scalar_lea.vmem %s1, %s223
      %p225 = scmp.lt.s32.totalorder %s21, 0
      %s226 = scalar_select %p225, %s21, 0
      %s227 = scalar_lea.vmem %s2, %s226
      %s228 = smul.u32 8, %s20
      %p229 = scmp.lt.s32.totalorder %s19, 1
      %s230 = scalar_select %p229, %s19, 1
      %p231 = scmp.lt.s32.totalorder %s228, 15
      %s232 = scalar_select %p231, %s228, 15
      %p233 = scmp.lt.s32.totalorder %s21, 0
      %s234 = scalar_select %p233, %s21, 0
      %s235 = smul.addr %s232, 2
      %s236 = sadd.s32 %s234, %s235
      %s237 = smul.addr %s230, 32
      %s238 = sadd.s32 %s236, %s237
      %s239 = smul.addr %s238, 8
      %s240 = scalar_lea.vmem %s3, %s239
      %s241 = smul.u32 8, %s20
      %s243 = smul.u32 %s20, 8
      %s244 = smul.u32 %s243, 3
      %s245 = smul.addr %s244, 4
      %s246 = scalar_lea.vmem %s220, %s245
      %v247 = vld [vmem:[%s246] sm:$0xf]
      %v248 = vld [vmem:[%s246 + $0x4] sm:$0xf]
      %v249 = vld [vmem:[%s246 + $0x8] sm:$0x1]
      %v250 = vld [vmem:[%s246 + $0xc] sm:$0xf]
      %v251 = vld [vmem:[%s246 + $0x10] sm:$0xf]
      %v252 = vld [vmem:[%s246 + $0x14] sm:$0x1]
      %v253 = vld [vmem:[%s246 + $0x18] sm:$0xf]
      %v254 = vld [vmem:[%s246 + $0x1c] sm:$0xf]
      %v255 = vld [vmem:[%s246 + $0x20] sm:$0x1]
      %v256 = vld [vmem:[%s246 + $0x24] sm:$0xf]
      %v257 = vld [vmem:[%s246 + $0x28] sm:$0xf]
      %v258 = vld [vmem:[%s246 + $0x2c] sm:$0x1]
      %v259 = vld [vmem:[%s246 + $0x30] sm:$0xf]
      %v260 = vld [vmem:[%s246 + $0x34] sm:$0xf]
      %v261 = vld [vmem:[%s246 + $0x38] sm:$0x1]
      %v262 = vld [vmem:[%s246 + $0x3c] sm:$0xf]
      %v263 = vld [vmem:[%s246 + $0x40] sm:$0xf]
      %v264 = vld [vmem:[%s246 + $0x44] sm:$0x1]
      %v265 = vld [vmem:[%s246 + $0x48] sm:$0xf]
      %v266 = vld [vmem:[%s246 + $0x4c] sm:$0xf]
      %v267 = vld [vmem:[%s246 + $0x50] sm:$0x1]
      %v268 = vld [vmem:[%s246 + $0x54] sm:$0xf]
      %v269 = vld [vmem:[%s246 + $0x58] sm:$0xf]
      %v270 = vld [vmem:[%s246 + $0x5c] sm:$0x1]
      %v271 = vld [vmem:[%s246 + $0x60] sm:$0xf]
      %v272 = vld [vmem:[%s246 + $0x64] sm:$0xf]
      %v273 = vld [vmem:[%s246 + $0x68] sm:$0x1]
      %v274 = vld [vmem:[%s246 + $0x6c] sm:$0xf]
      %v275 = vld [vmem:[%s246 + $0x70] sm:$0xf]
      %v276 = vld [vmem:[%s246 + $0x74] sm:$0x1]
      %v277 = vld [vmem:[%s224] sm:$0x3]
      %v278 = vld [vmem:[%s224] sm:$0xc]
      %vm279 = vsmask.f32 3328
      %vm280 = vsmask.f32 7440
      %vm281 = vmor %vm279, %vm280
      %v283 = vshrl.u32 %v247, 16
      %v285 = vrot.slane %v283, 4
      %v286 = vshll.u32 %v247, 16
      %v288 = vrot.slane %v286, 5
      %v289 = vor.u32 %v285, %v288
      %v290 = vrot.slane %v289, 4
      %v292 = vshll.u32 %v248, 16
      %v294 = vrot.slane %v292, 5
      %v295 = vsel %vm281, %v290, %v294
      %v296 = vshrl.u32 %v248, 16
      %v298 = vrot.slane %v296, 4
      %v299 = vor.u32 %v298, %v294
      %v300 = vrot.slane %v299, 4
      %v302 = vshll.u32 %v249, 16
      %v304 = vrot.slane %v302, 5
      %v305 = vsel %vm281, %v300, %v304
      %v307 = vshrl.u32 %v250, 16
      %v309 = vrot.slane %v307, 4
      %v310 = vshll.u32 %v250, 16
      %v312 = vrot.slane %v310, 5
      %v313 = vor.u32 %v309, %v312
      %v314 = vrot.slane %v313, 4
      %v316 = vshll.u32 %v251, 16
      %v318 = vrot.slane %v316, 5
      %v319 = vsel %vm281, %v314, %v318
      %v320 = vshrl.u32 %v251, 16
      %v322 = vrot.slane %v320, 4
      %v323 = vor.u32 %v322, %v318
      %v324 = vrot.slane %v323, 4
      %v326 = vshll.u32 %v252, 16
      %v328 = vrot.slane %v326, 5
      %v329 = vsel %vm281, %v324, %v328
      %v331 = vshrl.u32 %v253, 16
      %v333 = vrot.slane %v331, 4
      %v334 = vshll.u32 %v253, 16
      %v336 = vrot.slane %v334, 5
      %v337 = vor.u32 %v333, %v336
      %v338 = vrot.slane %v337, 4
      %v340 = vshll.u32 %v254, 16
      %v342 = vrot.slane %v340, 5
      %v343 = vsel %vm281, %v338, %v342
      %v344 = vshrl.u32 %v254, 16
      %v346 = vrot.slane %v344, 4
      %v347 = vor.u32 %v346, %v342
      %v348 = vrot.slane %v347, 4
      %v350 = vshll.u32 %v255, 16
      %v352 = vrot.slane %v350, 5
      %v353 = vsel %vm281, %v348, %v352
      %v355 = vshrl.u32 %v256, 16
      %v357 = vrot.slane %v355, 4
      %v358 = vshll.u32 %v256, 16
      %v360 = vrot.slane %v358, 5
      %v361 = vor.u32 %v357, %v360
      %v362 = vrot.slane %v361, 4
      %v364 = vshll.u32 %v257, 16
      %v366 = vrot.slane %v364, 5
      %v367 = vsel %vm281, %v362, %v366
      %v368 = vshrl.u32 %v257, 16
      %v370 = vrot.slane %v368, 4
      %v371 = vor.u32 %v370, %v366
      %v372 = vrot.slane %v371, 4
      %v374 = vshll.u32 %v258, 16
      %v376 = vrot.slane %v374, 5
      %v377 = vsel %vm281, %v372, %v376
      %v379 = vshrl.u32 %v259, 16
      %v381 = vrot.slane %v379, 4
      %v382 = vshll.u32 %v259, 16
      %v384 = vrot.slane %v382, 5
      %v385 = vor.u32 %v381, %v384
      %v386 = vrot.slane %v385, 4
      %v388 = vshll.u32 %v260, 16
      %v390 = vrot.slane %v388, 5
      %v391 = vsel %vm281, %v386, %v390
      %v392 = vshrl.u32 %v260, 16
      %v394 = vrot.slane %v392, 4
      %v395 = vor.u32 %v394, %v390
      %v396 = vrot.slane %v395, 4
      %v398 = vshll.u32 %v261, 16
      %v400 = vrot.slane %v398, 5
      %v401 = vsel %vm281, %v396, %v400
      %v403 = vshrl.u32 %v262, 16
      %v405 = vrot.slane %v403, 4
      %v406 = vshll.u32 %v262, 16
      %v408 = vrot.slane %v406, 5
      %v409 = vor.u32 %v405, %v408
      %v410 = vrot.slane %v409, 4
      %v412 = vshll.u32 %v263, 16
      %v414 = vrot.slane %v412, 5
      %v415 = vsel %vm281, %v410, %v414
      %v416 = vshrl.u32 %v263, 16
      %v418 = vrot.slane %v416, 4
      %v419 = vor.u32 %v418, %v414
      %v420 = vrot.slane %v419, 4
      %v422 = vshll.u32 %v264, 16
      %v424 = vrot.slane %v422, 5
      %v425 = vsel %vm281, %v420, %v424
      %v427 = vshrl.u32 %v265, 16
      %v429 = vrot.slane %v427, 4
      %v430 = vshll.u32 %v265, 16
      %v432 = vrot.slane %v430, 5
      %v433 = vor.u32 %v429, %v432
      %v434 = vrot.slane %v433, 4
      %v436 = vshll.u32 %v266, 16
      %v438 = vrot.slane %v436, 5
      %v439 = vsel %vm281, %v434, %v438
      %v440 = vshrl.u32 %v266, 16
      %v442 = vrot.slane %v440, 4
      %v443 = vor.u32 %v442, %v438
      %v444 = vrot.slane %v443, 4
      %v446 = vshll.u32 %v267, 16
      %v448 = vrot.slane %v446, 5
      %v449 = vsel %vm281, %v444, %v448
      %v451 = vshrl.u32 %v268, 16
      %v453 = vrot.slane %v451, 4
      %v454 = vshll.u32 %v268, 16
      %v456 = vrot.slane %v454, 5
      %v457 = vor.u32 %v453, %v456
      %v458 = vrot.slane %v457, 4
      %v460 = vshll.u32 %v269, 16
      %v462 = vrot.slane %v460, 5
      %v463 = vsel %vm281, %v458, %v462
      %v464 = vshrl.u32 %v269, 16
      %v466 = vrot.slane %v464, 4
      %v467 = vor.u32 %v466, %v462
      %v468 = vrot.slane %v467, 4
      %v470 = vshll.u32 %v270, 16
      %v472 = vrot.slane %v470, 5
      %v473 = vsel %vm281, %v468, %v472
      %v474 = vunpack.c.l.b16 %v295
      %v475 = vunpack.c.l.b16 %v305
      %v476 = vunpack.c.l.b16 %v319
      %v477 = vunpack.c.l.b16 %v329
      %v478 = vunpack.c.l.b16 %v343
      %v479 = vunpack.c.l.b16 %v353
      %v480 = vunpack.c.l.b16 %v367
      %v481 = vunpack.c.l.b16 %v377
      %v482 = vunpack.c.l.b16 %v391
      %v483 = vunpack.c.l.b16 %v401
      %v484 = vunpack.c.l.b16 %v415
      %v485 = vunpack.c.l.b16 %v425
      %v486 = vunpack.c.l.b16 %v439
      %v487 = vunpack.c.l.b16 %v449
      %v488 = vunpack.c.l.b16 %v463
      %v489 = vunpack.c.l.b16 %v473
      %v490 = vpack.c.b16 %v475, %v474
      %v491 = vpack.c.b16 %v477, %v476
      %v492 = vpack.c.b16 %v479, %v478
      %v493 = vpack.c.b16 %v481, %v480
      %v494 = vpack.c.b16 %v483, %v482
      %v495 = vpack.c.b16 %v485, %v484
      %v496 = vpack.c.b16 %v487, %v486
      %v497 = vpack.c.b16 %v489, %v488
      %v499 = vunpack.c.l.b16 %v278
      %v500 = vpack.c.b16 %v499, %v499
      %v501 = vrot.slane %v500, 2
      %vm502 = vcmask 31744
      %v504 = vsel %vm502, %v490, 0
      %v507 = vsel %vm502, %v491, 0
      %v510 = vsel %vm502, %v492, 0
      %v513 = vsel %vm502, %v493, 0
      %v516 = vsel %vm502, %v494, 0
      %v519 = vsel %vm502, %v495, 0
      %v522 = vsel %vm502, %v496, 0
      %v525 = vsel %vm502, %v497, 0
      %vm527 = vcmask 1041408
      %v529 = vsel %vm527, %v501, 0
      %531 = vmatprep.subr.bf16.mxu0 0
      %532 = vmatpush1.bf16.msra.mxu0 %v529
      %533 = vmatprep.subr.bf16.mxu0 0
      %534 = vmatpush1.bf16.msra.mxu0 0
      %535 = vmatprep.subr.bf16.mxu0 0
      %536 = vmatpush1.bf16.msra.mxu0 0
      %537 = vmatprep.subr.bf16.mxu0 0
      %538 = vmatpush1.bf16.msra.mxu0 0
      %539 = vmatprep.subr.bf16.mxu0 0
      %540 = vmatpush1.bf16.msra.mxu0 0
      %541 = vmatprep.subr.bf16.mxu0 0
      %542 = vmatpush1.bf16.msra.mxu0 0
      %543 = vmatprep.subr.bf16.mxu0 0
      %544 = vmatpush1.bf16.msra.mxu0 0
      %545 = vmatprep.subr.bf16.mxu0 0
      %546 = vmatpush1.bf16.msra.mxu0 0
      %547 = vmatprep.subr.bf16.mxu0 0
      %548 = vmatpush1.bf16.msra.mxu0 0
      %549 = vmatprep.subr.bf16.mxu0 0
      %550 = vmatpush1.bf16.msra.mxu0 0
      %551 = vmatprep.subr.bf16.mxu0 0
      %552 = vmatpush1.bf16.msra.mxu0 0
      %553 = vmatprep.subr.bf16.mxu0 0
      %554 = vmatpush1.bf16.msra.mxu0 0
      %555 = vmatprep.subr.bf16.mxu0 0
      %556 = vmatpush1.bf16.msra.mxu0 0
      %557 = vmatprep.subr.bf16.mxu0 0
      %558 = vmatpush1.bf16.msra.mxu0 0
      %559 = vmatprep.subr.bf16.mxu0 0
      %560 = vmatpush1.bf16.msra.mxu0 0
      %561 = vmatprep.subr.bf16.mxu0 0
      %562 = vmatpush1.bf16.msra.mxu0 0
      %563 = vmatprep.mubr.bf16.mxu0 0
      %564 = vmatmul.mubr.bf16.gmra.mrb[0].mxu0 %v504
      %v565 = vpop.f32.mrb[0].mxu0
      %v566 = vadd.f32 0.0, %v565
      %v567 = vpop.f32.mrb[0].mxu0
      %v568 = vpop.f32.mrb[0].mxu0
      %v569 = vadd.f32 0.0, %v568
      %v570 = vpop.f32.mrb[0].mxu0
      %571 = vmatprep.mubr.bf16.mxu0 0
      %572 = vmatmul.mubr.bf16.gmra.mrb[0].mxu0 %v507
      %v573 = vpop.f32.mrb[0].mxu0
      %v574 = vadd.f32 0.0, %v573
      %v575 = vpop.f32.mrb[0].mxu0
      %v576 = vpop.f32.mrb[0].mxu0
      %v577 = vadd.f32 0.0, %v576
      %v578 = vpop.f32.mrb[0].mxu0
      %579 = vmatprep.mubr.bf16.mxu0 0
      %580 = vmatmul.mubr.bf16.gmra.mrb[0].mxu0 %v510
      %v581 = vpop.f32.mrb[0].mxu0
      %v582 = vadd.f32 0.0, %v581
      %v583 = vpop.f32.mrb[0].mxu0
      %v584 = vpop.f32.mrb[0].mxu0
      %v585 = vadd.f32 0.0, %v584
      %v586 = vpop.f32.mrb[0].mxu0
      %587 = vmatprep.mubr.bf16.mxu0 0
      %588 = vmatmul.mubr.bf16.gmra.mrb[0].mxu0 %v513
      %v589 = vpop.f32.mrb[0].mxu0
      %v590 = vadd.f32 0.0, %v589
      %v591 = vpop.f32.mrb[0].mxu0
      %v592 = vpop.f32.mrb[0].mxu0
      %v593 = vadd.f32 0.0, %v592
      %v594 = vpop.f32.mrb[0].mxu0
      %595 = vmatprep.mubr.bf16.mxu0 0
      %596 = vmatmul.mubr.bf16.gmra.mrb[0].mxu0 %v516
      %v597 = vpop.f32.mrb[0].mxu0
      %v598 = vadd.f32 0.0, %v597
      %v599 = vpop.f32.mrb[0].mxu0
      %v600 = vpop.f32.mrb[0].mxu0
      %v601 = vadd.f32 0.0, %v600
      %v602 = vpop.f32.mrb[0].mxu0
      %603 = vmatprep.mubr.bf16.mxu0 0
      %604 = vmatmul.mubr.bf16.gmra.mrb[0].mxu0 %v519
      %v605 = vpop.f32.mrb[0].mxu0
      %v606 = vadd.f32 0.0, %v605
      %v607 = vpop.f32.mrb[0].mxu0
      %v608 = vpop.f32.mrb[0].mxu0
      %v609 = vadd.f32 0.0, %v608
      %v610 = vpop.f32.mrb[0].mxu0
      %611 = vmatprep.mubr.bf16.mxu0 0
      %612 = vmatmul.mubr.bf16.gmra.mrb[0].mxu0 %v522
      %v613 = vpop.f32.mrb[0].mxu0
      %v614 = vadd.f32 0.0, %v613
      %v615 = vpop.f32.mrb[0].mxu0
      %v616 = vpop.f32.mrb[0].mxu0
      %v617 = vadd.f32 0.0, %v616
      %v618 = vpop.f32.mrb[0].mxu0
      %619 = vmatprep.mubr.bf16.mxu0 0
      %620 = vmatmul.mubr.bf16.gmra.mrb[0].mxu0 %v525
      %v621 = vpop.f32.mrb[0].mxu0
      %v622 = vadd.f32 0.0, %v621
      %v623 = vpop.f32.mrb[0].mxu0
      %v624 = vpop.f32.mrb[0].mxu0
      %v625 = vadd.f32 0.0, %v624
      %v626 = vpop.f32.mrb[0].mxu0
      %627 = vdwg.mxu0
      %v644 = vunpack.c.l.b16 %v247
      %v645 = vunpack.c.l.b16 %v248
      %v646 = vunpack.c.l.b16 %v250
      %v647 = vunpack.c.l.b16 %v251
      %v648 = vunpack.c.l.b16 %v253
      %v649 = vunpack.c.l.b16 %v254
      %v650 = vunpack.c.l.b16 %v256
      %v651 = vunpack.c.l.b16 %v257
      %v652 = vunpack.c.l.b16 %v259
      %v653 = vunpack.c.l.b16 %v260
      %v654 = vunpack.c.l.b16 %v262
      %v655 = vunpack.c.l.b16 %v263
      %v656 = vunpack.c.l.b16 %v265
      %v657 = vunpack.c.l.b16 %v266
      %v658 = vunpack.c.l.b16 %v268
      %v659 = vunpack.c.l.b16 %v269
      %v660 = vpack.c.b16 %v645, %v644
      %v661 = vpack.c.b16 %v647, %v646
      %v662 = vpack.c.b16 %v649, %v648
      %v663 = vpack.c.b16 %v651, %v650
      %v664 = vpack.c.b16 %v653, %v652
      %v665 = vpack.c.b16 %v655, %v654
      %v666 = vpack.c.b16 %v657, %v656
      %v667 = vpack.c.b16 %v659, %v658
      %v669 = vsel %vm502, %v660, 0
      %v672 = vsel %vm502, %v661, 0
      %v675 = vsel %vm502, %v662, 0
      %v678 = vsel %vm502, %v663, 0
      %v681 = vsel %vm502, %v664, 0
      %v684 = vsel %vm502, %v665, 0
      %v687 = vsel %vm502, %v666, 0
      %v690 = vsel %vm502, %v667, 0
      %v693 = vsel %vm527, %v277, 0
      %695 = vmatprep.subr.bf16.mxu0 0
      %696 = vmatpush1.bf16.msra.mxu0 %v693
      %697 = vmatprep.subr.bf16.mxu0 0
      %698 = vmatpush1.bf16.msra.mxu0 0
      %699 = vmatprep.subr.bf16.mxu0 0
      %700 = vmatpush1.bf16.msra.mxu0 0
      %701 = vmatprep.subr.bf16.mxu0 0
      %702 = vmatpush1.bf16.msra.mxu0 0
      %703 = vmatprep.subr.bf16.mxu0 0
      %704 = vmatpush1.bf16.msra.mxu0 0
      %705 = vmatprep.subr.bf16.mxu0 0
      %706 = vmatpush1.bf16.msra.mxu0 0
      %707 = vmatprep.subr.bf16.mxu0 0
      %708 = vmatpush1.bf16.msra.mxu0 0
      %709 = vmatprep.subr.bf16.mxu0 0
      %710 = vmatpush1.bf16.msra.mxu0 0
      %711 = vmatprep.subr.bf16.mxu0 0
      %712 = vmatpush1.bf16.msra.mxu0 0
      %713 = vmatprep.subr.bf16.mxu0 0
      %714 = vmatpush1.bf16.msra.mxu0 0
      %715 = vmatprep.subr.bf16.mxu0 0
      %716 = vmatpush1.bf16.msra.mxu0 0
      %717 = vmatprep.subr.bf16.mxu0 0
      %718 = vmatpush1.bf16.msra.mxu0 0
      %719 = vmatprep.subr.bf16.mxu0 0
      %720 = vmatpush1.bf16.msra.mxu0 0
      %721 = vmatprep.subr.bf16.mxu0 0
      %722 = vmatpush1.bf16.msra.mxu0 0
      %723 = vmatprep.subr.bf16.mxu0 0
      %724 = vmatpush1.bf16.msra.mxu0 0
      %725 = vmatprep.subr.bf16.mxu0 0
      %726 = vmatpush1.bf16.msra.mxu0 0
      %727 = vmatprep.mubr.bf16.mxu0 0
      %728 = vmatmul.mubr.bf16.gmra.mrb[0].mxu0 %v669
      %v729 = vpop.f32.mrb[0].mxu0
      %v730 = vadd.f32 %v566, %v729
      %v731 = vpop.f32.mrb[0].mxu0
      %v732 = vpop.f32.mrb[0].mxu0
      %v733 = vadd.f32 %v569, %v732
      %v734 = vpop.f32.mrb[0].mxu0
      %735 = vmatprep.mubr.bf16.mxu0 0
      %736 = vmatmul.mubr.bf16.gmra.mrb[0].mxu0 %v672
      %v737 = vpop.f32.mrb[0].mxu0
      %v738 = vadd.f32 %v574, %v737
      %v739 = vpop.f32.mrb[0].mxu0
      %v740 = vpop.f32.mrb[0].mxu0
      %v741 = vadd.f32 %v577, %v740
      %v742 = vpop.f32.mrb[0].mxu0
      %743 = vmatprep.mubr.bf16.mxu0 0
      %744 = vmatmul.mubr.bf16.gmra.mrb[0].mxu0 %v675
      %v745 = vpop.f32.mrb[0].mxu0
      %v746 = vadd.f32 %v582, %v745
      %v747 = vpop.f32.mrb[0].mxu0
      %v748 = vpop.f32.mrb[0].mxu0
      %v749 = vadd.f32 %v585, %v748
      %v750 = vpop.f32.mrb[0].mxu0
      %751 = vmatprep.mubr.bf16.mxu0 0
      %752 = vmatmul.mubr.bf16.gmra.mrb[0].mxu0 %v678
      %v753 = vpop.f32.mrb[0].mxu0
      %v754 = vadd.f32 %v590, %v753
      %v755 = vpop.f32.mrb[0].mxu0
      %v756 = vpop.f32.mrb[0].mxu0
      %v757 = vadd.f32 %v593, %v756
      %v758 = vpop.f32.mrb[0].mxu0
      %759 = vmatprep.mubr.bf16.mxu0 0
      %760 = vmatmul.mubr.bf16.gmra.mrb[0].mxu0 %v681
      %v761 = vpop.f32.mrb[0].mxu0
      %v762 = vadd.f32 %v598, %v761
      %v763 = vpop.f32.mrb[0].mxu0
      %v764 = vpop.f32.mrb[0].mxu0
      %v765 = vadd.f32 %v601, %v764
      %v766 = vpop.f32.mrb[0].mxu0
      %767 = vmatprep.mubr.bf16.mxu0 0
      %768 = vmatmul.mubr.bf16.gmra.mrb[0].mxu0 %v684
      %v769 = vpop.f32.mrb[0].mxu0
      %v770 = vadd.f32 %v606, %v769
      %v771 = vpop.f32.mrb[0].mxu0
      %v772 = vpop.f32.mrb[0].mxu0
      %v773 = vadd.f32 %v609, %v772
      %v774 = vpop.f32.mrb[0].mxu0
      %775 = vmatprep.mubr.bf16.mxu0 0
      %776 = vmatmul.mubr.bf16.gmra.mrb[0].mxu0 %v687
      %v777 = vpop.f32.mrb[0].mxu0
      %v778 = vadd.f32 %v614, %v777
      %v779 = vpop.f32.mrb[0].mxu0
      %v780 = vpop.f32.mrb[0].mxu0
      %v781 = vadd.f32 %v617, %v780
      %v782 = vpop.f32.mrb[0].mxu0
      %783 = vmatprep.mubr.bf16.mxu0 0
      %784 = vmatmul.mubr.bf16.gmra.mrb[0].mxu0 %v690
      %v785 = vpop.f32.mrb[0].mxu0
      %v786 = vadd.f32 %v622, %v785
      %v787 = vpop.f32.mrb[0].mxu0
      %v788 = vpop.f32.mrb[0].mxu0
      %v789 = vadd.f32 %v625, %v788
      %v790 = vpop.f32.mrb[0].mxu0
      %791 = vdwg.mxu0
      %v792 = vld [vmem:[%s224 + $0x4] sm:$0x3]
      %vm801 = vcmask 1042432
      %vm802 = vcmask 1046532
      %vm803 = vmor %vm801, %vm802
      %v804 = vrot.slane %v247, 5
      %v805 = vrot.slane %v804, 4
      %v806 = vrot.slane %v248, 5
      %v807 = vsel %vm803, %v805, %v806
      %v808 = vrot.slane %v806, 4
      %v809 = vrot.slane %v249, 5
      %v810 = vsel %vm803, %v808, %v809
      %v811 = vrot.slane %v250, 5
      %v812 = vrot.slane %v811, 4
      %v813 = vrot.slane %v251, 5
      %v814 = vsel %vm803, %v812, %v813
      %v815 = vrot.slane %v813, 4
      %v816 = vrot.slane %v252, 5
      %v817 = vsel %vm803, %v815, %v816
      %v818 = vrot.slane %v253, 5
      %v819 = vrot.slane %v818, 4
      %v820 = vrot.slane %v254, 5
      %v821 = vsel %vm803, %v819, %v820
      %v822 = vrot.slane %v820, 4
      %v823 = vrot.slane %v255, 5
      %v824 = vsel %vm803, %v822, %v823
      %v825 = vrot.slane %v256, 5
      %v826 = vrot.slane %v825, 4
      %v827 = vrot.slane %v257, 5
      %v828 = vsel %vm803, %v826, %v827
      %v829 = vrot.slane %v827, 4
      %v830 = vrot.slane %v258, 5
      %v831 = vsel %vm803, %v829, %v830
      %v832 = vrot.slane %v259, 5
      %v833 = vrot.slane %v832, 4
      %v834 = vrot.slane %v260, 5
      %v835 = vsel %vm803, %v833, %v834
      %v836 = vrot.slane %v834, 4
      %v837 = vrot.slane %v261, 5
      %v838 = vsel %vm803, %v836, %v837
      %v839 = vrot.slane %v262, 5
      %v840 = vrot.slane %v839, 4
      %v841 = vrot.slane %v263, 5
      %v842 = vsel %vm803, %v840, %v841
      %v843 = vrot.slane %v841, 4
      %v844 = vrot.slane %v264, 5
      %v845 = vsel %vm803, %v843, %v844
      %v846 = vrot.slane %v265, 5
      %v847 = vrot.slane %v846, 4
      %v848 = vrot.slane %v266, 5
      %v849 = vsel %vm803, %v847, %v848
      %v850 = vrot.slane %v848, 4
      %v851 = vrot.slane %v267, 5
      %v852 = vsel %vm803, %v850, %v851
      %v853 = vrot.slane %v268, 5
      %v854 = vrot.slane %v853, 4
      %v855 = vrot.slane %v269, 5
      %v856 = vsel %vm803, %v854, %v855
      %v857 = vrot.slane %v855, 4
      %v858 = vrot.slane %v270, 5
      %v859 = vsel %vm803, %v857, %v858
      %v860 = vunpack.c.l.b16 %v807
      %v861 = vunpack.c.l.b16 %v810
      %v862 = vunpack.c.l.b16 %v814
      %v863 = vunpack.c.l.b16 %v817
      %v864 = vunpack.c.l.b16 %v821
      %v865 = vunpack.c.l.b16 %v824
      %v866 = vunpack.c.l.b16 %v828
      %v867 = vunpack.c.l.b16 %v831
      %v868 = vunpack.c.l.b16 %v835
      %v869 = vunpack.c.l.b16 %v838
      %v870 = vunpack.c.l.b16 %v842
      %v871 = vunpack.c.l.b16 %v845
      %v872 = vunpack.c.l.b16 %v849
      %v873 = vunpack.c.l.b16 %v852
      %v874 = vunpack.c.l.b16 %v856
      %v875 = vunpack.c.l.b16 %v859
      %v876 = vpack.c.b16 %v861, %v860
      %v877 = vpack.c.b16 %v863, %v862
      %v878 = vpack.c.b16 %v865, %v864
      %v879 = vpack.c.b16 %v867, %v866
      %v880 = vpack.c.b16 %v869, %v868
      %v881 = vpack.c.b16 %v871, %v870
      %v882 = vpack.c.b16 %v873, %v872
      %v883 = vpack.c.b16 %v875, %v874
      %v885 = vsel %vm502, %v876, 0
      %v888 = vsel %vm502, %v877, 0
      %v891 = vsel %vm502, %v878, 0
      %v894 = vsel %vm502, %v879, 0
      %v897 = vsel %vm502, %v880, 0
      %v900 = vsel %vm502, %v881, 0
      %v903 = vsel %vm502, %v882, 0
      %v906 = vsel %vm502, %v883, 0
      %v909 = vsel %vm527, %v792, 0
      %911 = vmatprep.subr.bf16.mxu0 0
      %912 = vmatpush1.bf16.msra.mxu0 %v909
      %913 = vmatprep.subr.bf16.mxu0 0
      %914 = vmatpush1.bf16.msra.mxu0 0
      %915 = vmatprep.subr.bf16.mxu0 0
      %916 = vmatpush1.bf16.msra.mxu0 0
      %917 = vmatprep.subr.bf16.mxu0 0
      %918 = vmatpush1.bf16.msra.mxu0 0
      %919 = vmatprep.subr.bf16.mxu0 0
      %920 = vmatpush1.bf16.msra.mxu0 0
      %921 = vmatprep.subr.bf16.mxu0 0
      %922 = vmatpush1.bf16.msra.mxu0 0
      %923 = vmatprep.subr.bf16.mxu0 0
      %924 = vmatpush1.bf16.msra.mxu0 0
      %925 = vmatprep.subr.bf16.mxu0 0
      %926 = vmatpush1.bf16.msra.mxu0 0
      %927 = vmatprep.subr.bf16.mxu0 0
      %928 = vmatpush1.bf16.msra.mxu0 0
      %929 = vmatprep.subr.bf16.mxu0 0
      %930 = vmatpush1.bf16.msra.mxu0 0
      %931 = vmatprep.subr.bf16.mxu0 0
      %932 = vmatpush1.bf16.msra.mxu0 0
      %933 = vmatprep.subr.bf16.mxu0 0
      %934 = vmatpush1.bf16.msra.mxu0 0
      %935 = vmatprep.subr.bf16.mxu0 0
      %936 = vmatpush1.bf16.msra.mxu0 0
      %937 = vmatprep.subr.bf16.mxu0 0
      %938 = vmatpush1.bf16.msra.mxu0 0
      %939 = vmatprep.subr.bf16.mxu0 0
      %940 = vmatpush1.bf16.msra.mxu0 0
      %941 = vmatprep.subr.bf16.mxu0 0
      %942 = vmatpush1.bf16.msra.mxu0 0
      %943 = vmatprep.mubr.bf16.mxu0 0
      %944 = vmatmul.mubr.bf16.gmra.mrb[0].mxu0 %v885
      %v945 = vpop.f32.mrb[0].mxu0
      %v946 = vadd.f32 0.0, %v945
      %v947 = vpop.f32.mrb[0].mxu0
      %v948 = vpop.f32.mrb[0].mxu0
      %v949 = vadd.f32 0.0, %v948
      %v950 = vpop.f32.mrb[0].mxu0
      %951 = vmatprep.mubr.bf16.mxu0 0
      %952 = vmatmul.mubr.bf16.gmra.mrb[0].mxu0 %v888
      %v953 = vpop.f32.mrb[0].mxu0
      %v954 = vadd.f32 0.0, %v953
      %v955 = vpop.f32.mrb[0].mxu0
      %v956 = vpop.f32.mrb[0].mxu0
      %v957 = vadd.f32 0.0, %v956
      %v958 = vpop.f32.mrb[0].mxu0
      %959 = vmatprep.mubr.bf16.mxu0 0
      %960 = vmatmul.mubr.bf16.gmra.mrb[0].mxu0 %v891
      %v961 = vpop.f32.mrb[0].mxu0
      %v962 = vadd.f32 0.0, %v961
      %v963 = vpop.f32.mrb[0].mxu0
      %v964 = vpop.f32.mrb[0].mxu0
      %v965 = vadd.f32 0.0, %v964
      %v966 = vpop.f32.mrb[0].mxu0
      %967 = vmatprep.mubr.bf16.mxu0 0
      %968 = vmatmul.mubr.bf16.gmra.mrb[0].mxu0 %v894
      %v969 = vpop.f32.mrb[0].mxu0
      %v970 = vadd.f32 0.0, %v969
      %v971 = vpop.f32.mrb[0].mxu0
      %v972 = vpop.f32.mrb[0].mxu0
      %v973 = vadd.f32 0.0, %v972
      %v974 = vpop.f32.mrb[0].mxu0
      %975 = vmatprep.mubr.bf16.mxu0 0
      %976 = vmatmul.mubr.bf16.gmra.mrb[0].mxu0 %v897
      %v977 = vpop.f32.mrb[0].mxu0
      %v978 = vadd.f32 0.0, %v977
      %v979 = vpop.f32.mrb[0].mxu0
      %v980 = vpop.f32.mrb[0].mxu0
      %v981 = vadd.f32 0.0, %v980
      %v982 = vpop.f32.mrb[0].mxu0
      %983 = vmatprep.mubr.bf16.mxu0 0
      %984 = vmatmul.mubr.bf16.gmra.mrb[0].mxu0 %v900
      %v985 = vpop.f32.mrb[0].mxu0
      %v986 = vadd.f32 0.0, %v985
      %v987 = vpop.f32.mrb[0].mxu0
      %v988 = vpop.f32.mrb[0].mxu0
      %v989 = vadd.f32 0.0, %v988
      %v990 = vpop.f32.mrb[0].mxu0
      %991 = vmatprep.mubr.bf16.mxu0 0
      %992 = vmatmul.mubr.bf16.gmra.mrb[0].mxu0 %v903
      %v993 = vpop.f32.mrb[0].mxu0
      %v994 = vadd.f32 0.0, %v993
      %v995 = vpop.f32.mrb[0].mxu0
      %v996 = vpop.f32.mrb[0].mxu0
      %v997 = vadd.f32 0.0, %v996
      %v998 = vpop.f32.mrb[0].mxu0
      %999 = vmatprep.mubr.bf16.mxu0 0
      %1000 = vmatmul.mubr.bf16.gmra.mrb[0].mxu0 %v906
      %v1001 = vpop.f32.mrb[0].mxu0
      %v1002 = vadd.f32 0.0, %v1001
      %v1003 = vpop.f32.mrb[0].mxu0
      %v1004 = vpop.f32.mrb[0].mxu0
      %v1005 = vadd.f32 0.0, %v1004
      %v1006 = vpop.f32.mrb[0].mxu0
      %1007 = vdwg.mxu0
      %v1008 = vadd.f32 %v730, %v946
      %v1009 = vadd.f32 %v733, %v949
      %v1010 = vadd.f32 %v738, %v954
      %v1011 = vadd.f32 %v741, %v957
      %v1012 = vadd.f32 %v746, %v962
      %v1013 = vadd.f32 %v749, %v965
      %v1014 = vadd.f32 %v754, %v970
      %v1015 = vadd.f32 %v757, %v973
      %v1016 = vadd.f32 %v762, %v978
      %v1017 = vadd.f32 %v765, %v981
      %v1018 = vadd.f32 %v770, %v986
      %v1019 = vadd.f32 %v773, %v989
      %v1020 = vadd.f32 %v778, %v994
      %v1021 = vadd.f32 %v781, %v997
      %v1022 = vadd.f32 %v786, %v1002
      %v1023 = vadd.f32 %v789, %v1005
      %v1024 = vld [vmem:[%s224 + $0x4] sm:$0xc]
      %v1027 = vunpack.c.l.b16 %v271
      %v1028 = vunpack.c.l.b16 %v272
      %v1029 = vpack.c.b16 %v1028, %v1027
      %v1031 = vunpack.c.l.b16 %v1024
      %v1032 = vpack.c.b16 %v1031, %v1031
      %v1033 = vrot.slane %v1032, 2
      %v1035 = vsel %vm502, %v1029, 0
      %v1038 = vsel %vm527, %v1033, 0
      %1040 = vmatprep.subr.bf16.mxu0 0
      %1041 = vmatpush1.bf16.msra.mxu0 %v1038
      %1042 = vmatprep.subr.bf16.mxu0 0
      %1043 = vmatpush1.bf16.msra.mxu0 0
      %1044 = vmatprep.subr.bf16.mxu0 0
      %1045 = vmatpush1.bf16.msra.mxu0 0
      %1046 = vmatprep.subr.bf16.mxu0 0
      %1047 = vmatpush1.bf16.msra.mxu0 0
      %1048 = vmatprep.subr.bf16.mxu0 0
      %1049 = vmatpush1.bf16.msra.mxu0 0
      %1050 = vmatprep.subr.bf16.mxu0 0
      %1051 = vmatpush1.bf16.msra.mxu0 0
      %1052 = vmatprep.subr.bf16.mxu0 0
      %1053 = vmatpush1.bf16.msra.mxu0 0
      %1054 = vmatprep.subr.bf16.mxu0 0
      %1055 = vmatpush1.bf16.msra.mxu0 0
      %1056 = vmatprep.subr.bf16.mxu0 0
      %1057 = vmatpush1.bf16.msra.mxu0 0
      %1058 = vmatprep.subr.bf16.mxu0 0
      %1059 = vmatpush1.bf16.msra.mxu0 0
      %1060 = vmatprep.subr.bf16.mxu0 0
      %1061 = vmatpush1.bf16.msra.mxu0 0
      %1062 = vmatprep.subr.bf16.mxu0 0
      %1063 = vmatpush1.bf16.msra.mxu0 0
      %1064 = vmatprep.subr.bf16.mxu0 0
      %1065 = vmatpush1.bf16.msra.mxu0 0
      %1066 = vmatprep.subr.bf16.mxu0 0
      %1067 = vmatpush1.bf16.msra.mxu0 0
      %1068 = vmatprep.subr.bf16.mxu0 0
      %1069 = vmatpush1.bf16.msra.mxu0 0
      %1070 = vmatprep.subr.bf16.mxu0 0
      %1071 = vmatpush1.bf16.msra.mxu0 0
      %1072 = vmatprep.mubr.bf16.mxu0 0
      %1073 = vmatmul.mubr.bf16.gmra.mrb[0].mxu0 %v672
      %v1074 = vpop.f32.mrb[0].mxu0
      %v1075 = vadd.f32 0.0, %v1074
      %v1076 = vpop.f32.mrb[0].mxu0
      %v1077 = vpop.f32.mrb[0].mxu0
      %v1078 = vadd.f32 0.0, %v1077
      %v1079 = vpop.f32.mrb[0].mxu0
      %1080 = vmatprep.mubr.bf16.mxu0 0
      %1081 = vmatmul.mubr.bf16.gmra.mrb[0].mxu0 %v675
      %v1082 = vpop.f32.mrb[0].mxu0
      %v1083 = vadd.f32 0.0, %v1082
      %v1084 = vpop.f32.mrb[0].mxu0
      %v1085 = vpop.f32.mrb[0].mxu0
      %v1086 = vadd.f32 0.0, %v1085
      %v1087 = vpop.f32.mrb[0].mxu0
      %1088 = vmatprep.mubr.bf16.mxu0 0
      %1089 = vmatmul.mubr.bf16.gmra.mrb[0].mxu0 %v678
      %v1090 = vpop.f32.mrb[0].mxu0
      %v1091 = vadd.f32 0.0, %v1090
      %v1092 = vpop.f32.mrb[0].mxu0
      %v1093 = vpop.f32.mrb[0].mxu0
      %v1094 = vadd.f32 0.0, %v1093
      %v1095 = vpop.f32.mrb[0].mxu0
      %1096 = vmatprep.mubr.bf16.mxu0 0
      %1097 = vmatmul.mubr.bf16.gmra.mrb[0].mxu0 %v681
      %v1098 = vpop.f32.mrb[0].mxu0
      %v1099 = vadd.f32 0.0, %v1098
      %v1100 = vpop.f32.mrb[0].mxu0
      %v1101 = vpop.f32.mrb[0].mxu0
      %v1102 = vadd.f32 0.0, %v1101
      %v1103 = vpop.f32.mrb[0].mxu0
      %1104 = vmatprep.mubr.bf16.mxu0 0
      %1105 = vmatmul.mubr.bf16.gmra.mrb[0].mxu0 %v684
      %v1106 = vpop.f32.mrb[0].mxu0
      %v1107 = vadd.f32 0.0, %v1106
      %v1108 = vpop.f32.mrb[0].mxu0
      %v1109 = vpop.f32.mrb[0].mxu0
      %v1110 = vadd.f32 0.0, %v1109
      %v1111 = vpop.f32.mrb[0].mxu0
      %1112 = vmatprep.mubr.bf16.mxu0 0
      %1113 = vmatmul.mubr.bf16.gmra.mrb[0].mxu0 %v687
      %v1114 = vpop.f32.mrb[0].mxu0
      %v1115 = vadd.f32 0.0, %v1114
      %v1116 = vpop.f32.mrb[0].mxu0
      %v1117 = vpop.f32.mrb[0].mxu0
      %v1118 = vadd.f32 0.0, %v1117
      %v1119 = vpop.f32.mrb[0].mxu0
      %1120 = vmatprep.mubr.bf16.mxu0 0
      %1121 = vmatmul.mubr.bf16.gmra.mrb[0].mxu0 %v690
      %v1122 = vpop.f32.mrb[0].mxu0
      %v1123 = vadd.f32 0.0, %v1122
      %v1124 = vpop.f32.mrb[0].mxu0
      %v1125 = vpop.f32.mrb[0].mxu0
      %v1126 = vadd.f32 0.0, %v1125
      %v1127 = vpop.f32.mrb[0].mxu0
      %1128 = vmatprep.mubr.bf16.mxu0 0
      %1129 = vmatmul.mubr.bf16.gmra.mrb[0].mxu0 %v1035
      %v1130 = vpop.f32.mrb[0].mxu0
      %v1131 = vadd.f32 0.0, %v1130
      %v1132 = vpop.f32.mrb[0].mxu0
      %v1133 = vpop.f32.mrb[0].mxu0
      %v1134 = vadd.f32 0.0, %v1133
      %v1135 = vpop.f32.mrb[0].mxu0
      %1136 = vdwg.mxu0
      %v1137 = vadd.f32 %v1008, %v1075
      %v1138 = vadd.f32 %v1009, %v1078
      %v1139 = vadd.f32 %v1010, %v1083
      %v1140 = vadd.f32 %v1011, %v1086
      %v1141 = vadd.f32 %v1012, %v1091
      %v1142 = vadd.f32 %v1013, %v1094
      %v1143 = vadd.f32 %v1014, %v1099
      %v1144 = vadd.f32 %v1015, %v1102
      %v1145 = vadd.f32 %v1016, %v1107
      %v1146 = vadd.f32 %v1017, %v1110
      %v1147 = vadd.f32 %v1018, %v1115
      %v1148 = vadd.f32 %v1019, %v1118
      %v1149 = vadd.f32 %v1020, %v1123
      %v1150 = vadd.f32 %v1021, %v1126
      %v1151 = vadd.f32 %v1022, %v1131
      %v1152 = vadd.f32 %v1023, %v1134
      %v1153 = vld [vmem:[%s224 + $0x8] sm:$0x3]
      %v1155 = vshrl.u32 %v271, 16
      %v1157 = vrot.slane %v1155, 4
      %v1158 = vshll.u32 %v271, 16
      %v1160 = vrot.slane %v1158, 5
      %v1161 = vor.u32 %v1157, %v1160
      %v1162 = vrot.slane %v1161, 4
      %v1164 = vshll.u32 %v272, 16
      %v1166 = vrot.slane %v1164, 5
      %v1167 = vsel %vm281, %v1162, %v1166
      %v1168 = vshrl.u32 %v272, 16
      %v1170 = vrot.slane %v1168, 4
      %v1171 = vor.u32 %v1170, %v1166
      %v1172 = vrot.slane %v1171, 4
      %v1174 = vshll.u32 %v273, 16
      %v1176 = vrot.slane %v1174, 5
      %v1177 = vsel %vm281, %v1172, %v1176
      %v1178 = vunpack.c.l.b16 %v1167
      %v1179 = vunpack.c.l.b16 %v1177
      %v1180 = vpack.c.b16 %v1179, %v1178
      %v1182 = vsel %vm502, %v1180, 0
      %v1185 = vsel %vm527, %v1153, 0
      %1187 = vmatprep.subr.bf16.mxu0 0
      %1188 = vmatpush1.bf16.msra.mxu0 %v1185
      %1189 = vmatprep.subr.bf16.mxu0 0
      %1190 = vmatpush1.bf16.msra.mxu0 0
      %1191 = vmatprep.subr.bf16.mxu0 0
      %1192 = vmatpush1.bf16.msra.mxu0 0
      %1193 = vmatprep.subr.bf16.mxu0 0
      %1194 = vmatpush1.bf16.msra.mxu0 0
      %1195 = vmatprep.subr.bf16.mxu0 0
      %1196 = vmatpush1.bf16.msra.mxu0 0
      %1197 = vmatprep.subr.bf16.mxu0 0
      %1198 = vmatpush1.bf16.msra.mxu0 0
      %1199 = vmatprep.subr.bf16.mxu0 0
      %1200 = vmatpush1.bf16.msra.mxu0 0
      %1201 = vmatprep.subr.bf16.mxu0 0
      %1202 = vmatpush1.bf16.msra.mxu0 0
      %1203 = vmatprep.subr.bf16.mxu0 0
      %1204 = vmatpush1.bf16.msra.mxu0 0
      %1205 = vmatprep.subr.bf16.mxu0 0
      %1206 = vmatpush1.bf16.msra.mxu0 0
      %1207 = vmatprep.subr.bf16.mxu0 0
      %1208 = vmatpush1.bf16.msra.mxu0 0
      %1209 = vmatprep.subr.bf16.mxu0 0
      %1210 = vmatpush1.bf16.msra.mxu0 0
      %1211 = vmatprep.subr.bf16.mxu0 0
      %1212 = vmatpush1.bf16.msra.mxu0 0
      %1213 = vmatprep.subr.bf16.mxu0 0
      %1214 = vmatpush1.bf16.msra.mxu0 0
      %1215 = vmatprep.subr.bf16.mxu0 0
      %1216 = vmatpush1.bf16.msra.mxu0 0
      %1217 = vmatprep.subr.bf16.mxu0 0
      %1218 = vmatpush1.bf16.msra.mxu0 0
      %1219 = vmatprep.mubr.bf16.mxu0 0
      %1220 = vmatmul.mubr.bf16.gmra.mrb[0].mxu0 %v507
      %v1221 = vpop.f32.mrb[0].mxu0
      %v1222 = vadd.f32 0.0, %v1221
      %v1223 = vpop.f32.mrb[0].mxu0
      %v1224 = vpop.f32.mrb[0].mxu0
      %v1225 = vadd.f32 0.0, %v1224
      %v1226 = vpop.f32.mrb[0].mxu0
      %1227 = vmatprep.mubr.bf16.mxu0 0
      %1228 = vmatmul.mubr.bf16.gmra.mrb[0].mxu0 %v510
      %v1229 = vpop.f32.mrb[0].mxu0
      %v1230 = vadd.f32 0.0, %v1229
      %v1231 = vpop.f32.mrb[0].mxu0
      %v1232 = vpop.f32.mrb[0].mxu0
      %v1233 = vadd.f32 0.0, %v1232
      %v1234 = vpop.f32.mrb[0].mxu0
      %1235 = vmatprep.mubr.bf16.mxu0 0
      %1236 = vmatmul.mubr.bf16.gmra.mrb[0].mxu0 %v513
      %v1237 = vpop.f32.mrb[0].mxu0
      %v1238 = vadd.f32 0.0, %v1237
      %v1239 = vpop.f32.mrb[0].mxu0
      %v1240 = vpop.f32.mrb[0].mxu0
      %v1241 = vadd.f32 0.0, %v1240
      %v1242 = vpop.f32.mrb[0].mxu0
      %1243 = vmatprep.mubr.bf16.mxu0 0
      %1244 = vmatmul.mubr.bf16.gmra.mrb[0].mxu0 %v516
      %v1245 = vpop.f32.mrb[0].mxu0
      %v1246 = vadd.f32 0.0, %v1245
      %v1247 = vpop.f32.mrb[0].mxu0
      %v1248 = vpop.f32.mrb[0].mxu0
      %v1249 = vadd.f32 0.0, %v1248
      %v1250 = vpop.f32.mrb[0].mxu0
      %1251 = vmatprep.mubr.bf16.mxu0 0
      %1252 = vmatmul.mubr.bf16.gmra.mrb[0].mxu0 %v519
      %v1253 = vpop.f32.mrb[0].mxu0
      %v1254 = vadd.f32 0.0, %v1253
      %v1255 = vpop.f32.mrb[0].mxu0
      %v1256 = vpop.f32.mrb[0].mxu0
      %v1257 = vadd.f32 0.0, %v1256
      %v1258 = vpop.f32.mrb[0].mxu0
      %1259 = vmatprep.mubr.bf16.mxu0 0
      %1260 = vmatmul.mubr.bf16.gmra.mrb[0].mxu0 %v522
      %v1261 = vpop.f32.mrb[0].mxu0
      %v1262 = vadd.f32 0.0, %v1261
      %v1263 = vpop.f32.mrb[0].mxu0
      %v1264 = vpop.f32.mrb[0].mxu0
      %v1265 = vadd.f32 0.0, %v1264
      %v1266 = vpop.f32.mrb[0].mxu0
      %1267 = vmatprep.mubr.bf16.mxu0 0
      %1268 = vmatmul.mubr.bf16.gmra.mrb[0].mxu0 %v525
      %v1269 = vpop.f32.mrb[0].mxu0
      %v1270 = vadd.f32 0.0, %v1269
      %v1271 = vpop.f32.mrb[0].mxu0
      %v1272 = vpop.f32.mrb[0].mxu0
      %v1273 = vadd.f32 0.0, %v1272
      %v1274 = vpop.f32.mrb[0].mxu0
      %1275 = vmatprep.mubr.bf16.mxu0 0
      %1276 = vmatmul.mubr.bf16.gmra.mrb[0].mxu0 %v1182
      %v1277 = vpop.f32.mrb[0].mxu0
      %v1278 = vadd.f32 0.0, %v1277
      %v1279 = vpop.f32.mrb[0].mxu0
      %v1280 = vpop.f32.mrb[0].mxu0
      %v1281 = vadd.f32 0.0, %v1280
      %v1282 = vpop.f32.mrb[0].mxu0
      %1283 = vdwg.mxu0
      %v1284 = vadd.f32 %v1137, %v1222
      %v1285 = vadd.f32 %v1138, %v1225
      %v1286 = vadd.f32 %v1139, %v1230
      %v1287 = vadd.f32 %v1140, %v1233
      %v1288 = vadd.f32 %v1141, %v1238
      %v1289 = vadd.f32 %v1142, %v1241
      %v1290 = vadd.f32 %v1143, %v1246
      %v1291 = vadd.f32 %v1144, %v1249
      %v1292 = vadd.f32 %v1145, %v1254
      %v1293 = vadd.f32 %v1146, %v1257
      %v1294 = vadd.f32 %v1147, %v1262
      %v1295 = vadd.f32 %v1148, %v1265
      %v1296 = vadd.f32 %v1149, %v1270
      %v1297 = vadd.f32 %v1150, %v1273
      %v1298 = vadd.f32 %v1151, %v1278
      %v1299 = vadd.f32 %v1152, %v1281
      %v1300 = vld [vmem:[%s224 + $0x8] sm:$0xc]
      %v1302 = vrot.slane %v271, 5
      %v1303 = vrot.slane %v1302, 4
      %v1304 = vrot.slane %v272, 5
      %v1305 = vsel %vm803, %v1303, %v1304
      %v1306 = vrot.slane %v1304, 4
      %v1307 = vrot.slane %v273, 5
      %v1308 = vsel %vm803, %v1306, %v1307
      %v1309 = vunpack.c.l.b16 %v1305
      %v1310 = vunpack.c.l.b16 %v1308
      %v1311 = vpack.c.b16 %v1310, %v1309
      %v1313 = vunpack.c.l.b16 %v1300
      %v1314 = vpack.c.b16 %v1313, %v1313
      %v1315 = vrot.slane %v1314, 2
      %v1317 = vsel %vm502, %v1311, 0
      %v1320 = vsel %vm527, %v1315, 0
      %1322 = vmatprep.subr.bf16.mxu0 0
      %1323 = vmatpush1.bf16.msra.mxu0 %v1320
      %1324 = vmatprep.subr.bf16.mxu0 0
      %1325 = vmatpush1.bf16.msra.mxu0 0
      %1326 = vmatprep.subr.bf16.mxu0 0
      %1327 = vmatpush1.bf16.msra.mxu0 0
      %1328 = vmatprep.subr.bf16.mxu0 0
      %1329 = vmatpush1.bf16.msra.mxu0 0
      %1330 = vmatprep.subr.bf16.mxu0 0
      %1331 = vmatpush1.bf16.msra.mxu0 0
      %1332 = vmatprep.subr.bf16.mxu0 0
      %1333 = vmatpush1.bf16.msra.mxu0 0
      %1334 = vmatprep.subr.bf16.mxu0 0
      %1335 = vmatpush1.bf16.msra.mxu0 0
      %1336 = vmatprep.subr.bf16.mxu0 0
      %1337 = vmatpush1.bf16.msra.mxu0 0
      %1338 = vmatprep.subr.bf16.mxu0 0
      %1339 = vmatpush1.bf16.msra.mxu0 0
      %1340 = vmatprep.subr.bf16.mxu0 0
      %1341 = vmatpush1.bf16.msra.mxu0 0
      %1342 = vmatprep.subr.bf16.mxu0 0
      %1343 = vmatpush1.bf16.msra.mxu0 0
      %1344 = vmatprep.subr.bf16.mxu0 0
      %1345 = vmatpush1.bf16.msra.mxu0 0
      %1346 = vmatprep.subr.bf16.mxu0 0
      %1347 = vmatpush1.bf16.msra.mxu0 0
      %1348 = vmatprep.subr.bf16.mxu0 0
      %1349 = vmatpush1.bf16.msra.mxu0 0
      %1350 = vmatprep.subr.bf16.mxu0 0
      %1351 = vmatpush1.bf16.msra.mxu0 0
      %1352 = vmatprep.subr.bf16.mxu0 0
      %1353 = vmatpush1.bf16.msra.mxu0 0
      %1354 = vmatprep.mubr.bf16.mxu0 0
      %1355 = vmatmul.mubr.bf16.gmra.mrb[0].mxu0 %v888
      %v1356 = vpop.f32.mrb[0].mxu0
      %v1357 = vadd.f32 0.0, %v1356
      %v1358 = vpop.f32.mrb[0].mxu0
      %v1359 = vpop.f32.mrb[0].mxu0
      %v1360 = vadd.f32 0.0, %v1359
      %v1361 = vpop.f32.mrb[0].mxu0
      %1362 = vmatprep.mubr.bf16.mxu0 0
      %1363 = vmatmul.mubr.bf16.gmra.mrb[0].mxu0 %v891
      %v1364 = vpop.f32.mrb[0].mxu0
      %v1365 = vadd.f32 0.0, %v1364
      %v1366 = vpop.f32.mrb[0].mxu0
      %v1367 = vpop.f32.mrb[0].mxu0
      %v1368 = vadd.f32 0.0, %v1367
      %v1369 = vpop.f32.mrb[0].mxu0
      %1370 = vmatprep.mubr.bf16.mxu0 0
      %1371 = vmatmul.mubr.bf16.gmra.mrb[0].mxu0 %v894
      %v1372 = vpop.f32.mrb[0].mxu0
      %v1373 = vadd.f32 0.0, %v1372
      %v1374 = vpop.f32.mrb[0].mxu0
      %v1375 = vpop.f32.mrb[0].mxu0
      %v1376 = vadd.f32 0.0, %v1375
      %v1377 = vpop.f32.mrb[0].mxu0
      %1378 = vmatprep.mubr.bf16.mxu0 0
      %1379 = vmatmul.mubr.bf16.gmra.mrb[0].mxu0 %v897
      %v1380 = vpop.f32.mrb[0].mxu0
      %v1381 = vadd.f32 0.0, %v1380
      %v1382 = vpop.f32.mrb[0].mxu0
      %v1383 = vpop.f32.mrb[0].mxu0
      %v1384 = vadd.f32 0.0, %v1383
      %v1385 = vpop.f32.mrb[0].mxu0
      %1386 = vmatprep.mubr.bf16.mxu0 0
      %1387 = vmatmul.mubr.bf16.gmra.mrb[0].mxu0 %v900
      %v1388 = vpop.f32.mrb[0].mxu0
      %v1389 = vadd.f32 0.0, %v1388
      %v1390 = vpop.f32.mrb[0].mxu0
      %v1391 = vpop.f32.mrb[0].mxu0
      %v1392 = vadd.f32 0.0, %v1391
      %v1393 = vpop.f32.mrb[0].mxu0
      %1394 = vmatprep.mubr.bf16.mxu0 0
      %1395 = vmatmul.mubr.bf16.gmra.mrb[0].mxu0 %v903
      %v1396 = vpop.f32.mrb[0].mxu0
      %v1397 = vadd.f32 0.0, %v1396
      %v1398 = vpop.f32.mrb[0].mxu0
      %v1399 = vpop.f32.mrb[0].mxu0
      %v1400 = vadd.f32 0.0, %v1399
      %v1401 = vpop.f32.mrb[0].mxu0
      %1402 = vmatprep.mubr.bf16.mxu0 0
      %1403 = vmatmul.mubr.bf16.gmra.mrb[0].mxu0 %v906
      %v1404 = vpop.f32.mrb[0].mxu0
      %v1405 = vadd.f32 0.0, %v1404
      %v1406 = vpop.f32.mrb[0].mxu0
      %v1407 = vpop.f32.mrb[0].mxu0
      %v1408 = vadd.f32 0.0, %v1407
      %v1409 = vpop.f32.mrb[0].mxu0
      %1410 = vmatprep.mubr.bf16.mxu0 0
      %1411 = vmatmul.mubr.bf16.gmra.mrb[0].mxu0 %v1317
      %v1412 = vpop.f32.mrb[0].mxu0
      %v1413 = vadd.f32 0.0, %v1412
      %v1414 = vpop.f32.mrb[0].mxu0
      %v1415 = vpop.f32.mrb[0].mxu0
      %v1416 = vadd.f32 0.0, %v1415
      %v1417 = vpop.f32.mrb[0].mxu0
      %1418 = vdwg.mxu0
      %v1419 = vadd.f32 %v1284, %v1357
      %v1420 = vadd.f32 %v1285, %v1360
      %v1421 = vadd.f32 %v1286, %v1365
      %v1422 = vadd.f32 %v1287, %v1368
      %v1423 = vadd.f32 %v1288, %v1373
      %v1424 = vadd.f32 %v1289, %v1376
      %v1425 = vadd.f32 %v1290, %v1381
      %v1426 = vadd.f32 %v1291, %v1384
      %v1427 = vadd.f32 %v1292, %v1389
      %v1428 = vadd.f32 %v1293, %v1392
      %v1429 = vadd.f32 %v1294, %v1397
      %v1430 = vadd.f32 %v1295, %v1400
      %v1431 = vadd.f32 %v1296, %v1405
      %v1432 = vadd.f32 %v1297, %v1408
      %v1433 = vadd.f32 %v1298, %v1413
      %v1434 = vadd.f32 %v1299, %v1416
      %v1435 = vld [vmem:[%s224 + $0xc] sm:$0x3]
      %v1438 = vunpack.c.l.b16 %v274
      %v1439 = vunpack.c.l.b16 %v275
      %v1440 = vpack.c.b16 %v1439, %v1438
      %v1442 = vsel %vm502, %v1440, 0
      %v1445 = vsel %vm527, %v1435, 0
      %1447 = vmatprep.subr.bf16.mxu0 0
      %1448 = vmatpush1.bf16.msra.mxu0 %v1445
      %1449 = vmatprep.subr.bf16.mxu0 0
      %1450 = vmatpush1.bf16.msra.mxu0 0
      %1451 = vmatprep.subr.bf16.mxu0 0
      %1452 = vmatpush1.bf16.msra.mxu0 0
      %1453 = vmatprep.subr.bf16.mxu0 0
      %1454 = vmatpush1.bf16.msra.mxu0 0
      %1455 = vmatprep.subr.bf16.mxu0 0
      %1456 = vmatpush1.bf16.msra.mxu0 0
      %1457 = vmatprep.subr.bf16.mxu0 0
      %1458 = vmatpush1.bf16.msra.mxu0 0
      %1459 = vmatprep.subr.bf16.mxu0 0
      %1460 = vmatpush1.bf16.msra.mxu0 0
      %1461 = vmatprep.subr.bf16.mxu0 0
      %1462 = vmatpush1.bf16.msra.mxu0 0
      %1463 = vmatprep.subr.bf16.mxu0 0
      %1464 = vmatpush1.bf16.msra.mxu0 0
      %1465 = vmatprep.subr.bf16.mxu0 0
      %1466 = vmatpush1.bf16.msra.mxu0 0
      %1467 = vmatprep.subr.bf16.mxu0 0
      %1468 = vmatpush1.bf16.msra.mxu0 0
      %1469 = vmatprep.subr.bf16.mxu0 0
      %1470 = vmatpush1.bf16.msra.mxu0 0
      %1471 = vmatprep.subr.bf16.mxu0 0
      %1472 = vmatpush1.bf16.msra.mxu0 0
      %1473 = vmatprep.subr.bf16.mxu0 0
      %1474 = vmatpush1.bf16.msra.mxu0 0
      %1475 = vmatprep.subr.bf16.mxu0 0
      %1476 = vmatpush1.bf16.msra.mxu0 0
      %1477 = vmatprep.subr.bf16.mxu0 0
      %1478 = vmatpush1.bf16.msra.mxu0 0
      %1479 = vmatprep.mubr.bf16.mxu0 0
      %1480 = vmatmul.mubr.bf16.gmra.mrb[0].mxu0 %v675
      %v1481 = vpop.f32.mrb[0].mxu0
      %v1482 = vadd.f32 0.0, %v1481
      %v1483 = vpop.f32.mrb[0].mxu0
      %v1484 = vpop.f32.mrb[0].mxu0
      %v1485 = vadd.f32 0.0, %v1484
      %v1486 = vpop.f32.mrb[0].mxu0
      %1487 = vmatprep.mubr.bf16.mxu0 0
      %1488 = vmatmul.mubr.bf16.gmra.mrb[0].mxu0 %v678
      %v1489 = vpop.f32.mrb[0].mxu0
      %v1490 = vadd.f32 0.0, %v1489
      %v1491 = vpop.f32.mrb[0].mxu0
      %v1492 = vpop.f32.mrb[0].mxu0
      %v1493 = vadd.f32 0.0, %v1492
      %v1494 = vpop.f32.mrb[0].mxu0
      %1495 = vmatprep.mubr.bf16.mxu0 0
      %1496 = vmatmul.mubr.bf16.gmra.mrb[0].mxu0 %v681
      %v1497 = vpop.f32.mrb[0].mxu0
      %v1498 = vadd.f32 0.0, %v1497
      %v1499 = vpop.f32.mrb[0].mxu0
      %v1500 = vpop.f32.mrb[0].mxu0
      %v1501 = vadd.f32 0.0, %v1500
      %v1502 = vpop.f32.mrb[0].mxu0
      %1503 = vmatprep.mubr.bf16.mxu0 0
      %1504 = vmatmul.mubr.bf16.gmra.mrb[0].mxu0 %v684
      %v1505 = vpop.f32.mrb[0].mxu0
      %v1506 = vadd.f32 0.0, %v1505
      %v1507 = vpop.f32.mrb[0].mxu0
      %v1508 = vpop.f32.mrb[0].mxu0
      %v1509 = vadd.f32 0.0, %v1508
      %v1510 = vpop.f32.mrb[0].mxu0
      %1511 = vmatprep.mubr.bf16.mxu0 0
      %1512 = vmatmul.mubr.bf16.gmra.mrb[0].mxu0 %v687
      %v1513 = vpop.f32.mrb[0].mxu0
      %v1514 = vadd.f32 0.0, %v1513
      %v1515 = vpop.f32.mrb[0].mxu0
      %v1516 = vpop.f32.mrb[0].mxu0
      %v1517 = vadd.f32 0.0, %v1516
      %v1518 = vpop.f32.mrb[0].mxu0
      %1519 = vmatprep.mubr.bf16.mxu0 0
      %1520 = vmatmul.mubr.bf16.gmra.mrb[0].mxu0 %v690
      %v1521 = vpop.f32.mrb[0].mxu0
      %v1522 = vadd.f32 0.0, %v1521
      %v1523 = vpop.f32.mrb[0].mxu0
      %v1524 = vpop.f32.mrb[0].mxu0
      %v1525 = vadd.f32 0.0, %v1524
      %v1526 = vpop.f32.mrb[0].mxu0
      %1527 = vmatprep.mubr.bf16.mxu0 0
      %1528 = vmatmul.mubr.bf16.gmra.mrb[0].mxu0 %v1035
      %v1529 = vpop.f32.mrb[0].mxu0
      %v1530 = vadd.f32 0.0, %v1529
      %v1531 = vpop.f32.mrb[0].mxu0
      %v1532 = vpop.f32.mrb[0].mxu0
      %v1533 = vadd.f32 0.0, %v1532
      %v1534 = vpop.f32.mrb[0].mxu0
      %1535 = vmatprep.mubr.bf16.mxu0 0
      %1536 = vmatmul.mubr.bf16.gmra.mrb[0].mxu0 %v1442
      %v1537 = vpop.f32.mrb[0].mxu0
      %v1538 = vadd.f32 0.0, %v1537
      %v1539 = vpop.f32.mrb[0].mxu0
      %v1540 = vpop.f32.mrb[0].mxu0
      %v1541 = vadd.f32 0.0, %v1540
      %v1542 = vpop.f32.mrb[0].mxu0
      %1543 = vdwg.mxu0
      %v1544 = vadd.f32 %v1419, %v1482
      %v1545 = vadd.f32 %v1420, %v1485
      %v1546 = vadd.f32 %v1421, %v1490
      %v1547 = vadd.f32 %v1422, %v1493
      %v1548 = vadd.f32 %v1423, %v1498
      %v1549 = vadd.f32 %v1424, %v1501
      %v1550 = vadd.f32 %v1425, %v1506
      %v1551 = vadd.f32 %v1426, %v1509
      %v1552 = vadd.f32 %v1427, %v1514
      %v1553 = vadd.f32 %v1428, %v1517
      %v1554 = vadd.f32 %v1429, %v1522
      %v1555 = vadd.f32 %v1430, %v1525
      %v1556 = vadd.f32 %v1431, %v1530
      %v1557 = vadd.f32 %v1432, %v1533
      %v1558 = vadd.f32 %v1433, %v1538
      %v1559 = vadd.f32 %v1434, %v1541
      %v1560 = vld [vmem:[%s224 + $0xc] sm:$0xc]
      %v1562 = vshrl.u32 %v274, 16
      %v1564 = vrot.slane %v1562, 4
      %v1565 = vshll.u32 %v274, 16
      %v1567 = vrot.slane %v1565, 5
      %v1568 = vor.u32 %v1564, %v1567
      %v1569 = vrot.slane %v1568, 4
      %v1571 = vshll.u32 %v275, 16
      %v1573 = vrot.slane %v1571, 5
      %v1574 = vsel %vm281, %v1569, %v1573
      %v1575 = vshrl.u32 %v275, 16
      %v1577 = vrot.slane %v1575, 4
      %v1578 = vor.u32 %v1577, %v1573
      %v1579 = vrot.slane %v1578, 4
      %v1581 = vshll.u32 %v276, 16
      %v1583 = vrot.slane %v1581, 5
      %v1584 = vsel %vm281, %v1579, %v1583
      %v1585 = vunpack.c.l.b16 %v1574
      %v1586 = vunpack.c.l.b16 %v1584
      %v1587 = vpack.c.b16 %v1586, %v1585
      %v1589 = vunpack.c.l.b16 %v1560
      %v1590 = vpack.c.b16 %v1589, %v1589
      %v1591 = vrot.slane %v1590, 2
      %v1593 = vsel %vm502, %v1587, 0
      %v1596 = vsel %vm527, %v1591, 0
      %1598 = vmatprep.subr.bf16.mxu0 0
      %1599 = vmatpush1.bf16.msra.mxu0 %v1596
      %1600 = vmatprep.subr.bf16.mxu0 0
      %1601 = vmatpush1.bf16.msra.mxu0 0
      %1602 = vmatprep.subr.bf16.mxu0 0
      %1603 = vmatpush1.bf16.msra.mxu0 0
      %1604 = vmatprep.subr.bf16.mxu0 0
      %1605 = vmatpush1.bf16.msra.mxu0 0
      %1606 = vmatprep.subr.bf16.mxu0 0
      %1607 = vmatpush1.bf16.msra.mxu0 0
      %1608 = vmatprep.subr.bf16.mxu0 0
      %1609 = vmatpush1.bf16.msra.mxu0 0
      %1610 = vmatprep.subr.bf16.mxu0 0
      %1611 = vmatpush1.bf16.msra.mxu0 0
      %1612 = vmatprep.subr.bf16.mxu0 0
      %1613 = vmatpush1.bf16.msra.mxu0 0
      %1614 = vmatprep.subr.bf16.mxu0 0
      %1615 = vmatpush1.bf16.msra.mxu0 0
      %1616 = vmatprep.subr.bf16.mxu0 0
      %1617 = vmatpush1.bf16.msra.mxu0 0
      %1618 = vmatprep.subr.bf16.mxu0 0
      %1619 = vmatpush1.bf16.msra.mxu0 0
      %1620 = vmatprep.subr.bf16.mxu0 0
      %1621 = vmatpush1.bf16.msra.mxu0 0
      %1622 = vmatprep.subr.bf16.mxu0 0
      %1623 = vmatpush1.bf16.msra.mxu0 0
      %1624 = vmatprep.subr.bf16.mxu0 0
      %1625 = vmatpush1.bf16.msra.mxu0 0
      %1626 = vmatprep.subr.bf16.mxu0 0
      %1627 = vmatpush1.bf16.msra.mxu0 0
      %1628 = vmatprep.subr.bf16.mxu0 0
      %1629 = vmatpush1.bf16.msra.mxu0 0
      %1630 = vmatprep.mubr.bf16.mxu0 0
      %1631 = vmatmul.mubr.bf16.gmra.mrb[0].mxu0 %v510
      %v1632 = vpop.f32.mrb[0].mxu0
      %v1633 = vadd.f32 0.0, %v1632
      %v1634 = vpop.f32.mrb[0].mxu0
      %v1635 = vpop.f32.mrb[0].mxu0
      %v1636 = vadd.f32 0.0, %v1635
      %v1637 = vpop.f32.mrb[0].mxu0
      %1638 = vmatprep.mubr.bf16.mxu0 0
      %1639 = vmatmul.mubr.bf16.gmra.mrb[0].mxu0 %v513
      %v1640 = vpop.f32.mrb[0].mxu0
      %v1641 = vadd.f32 0.0, %v1640
      %v1642 = vpop.f32.mrb[0].mxu0
      %v1643 = vpop.f32.mrb[0].mxu0
      %v1644 = vadd.f32 0.0, %v1643
      %v1645 = vpop.f32.mrb[0].mxu0
      %1646 = vmatprep.mubr.bf16.mxu0 0
      %1647 = vmatmul.mubr.bf16.gmra.mrb[0].mxu0 %v516
      %v1648 = vpop.f32.mrb[0].mxu0
      %v1649 = vadd.f32 0.0, %v1648
      %v1650 = vpop.f32.mrb[0].mxu0
      %v1651 = vpop.f32.mrb[0].mxu0
      %v1652 = vadd.f32 0.0, %v1651
      %v1653 = vpop.f32.mrb[0].mxu0
      %1654 = vmatprep.mubr.bf16.mxu0 0
      %1655 = vmatmul.mubr.bf16.gmra.mrb[0].mxu0 %v519
      %v1656 = vpop.f32.mrb[0].mxu0
      %v1657 = vadd.f32 0.0, %v1656
      %v1658 = vpop.f32.mrb[0].mxu0
      %v1659 = vpop.f32.mrb[0].mxu0
      %v1660 = vadd.f32 0.0, %v1659
      %v1661 = vpop.f32.mrb[0].mxu0
      %1662 = vmatprep.mubr.bf16.mxu0 0
      %1663 = vmatmul.mubr.bf16.gmra.mrb[0].mxu0 %v522
      %v1664 = vpop.f32.mrb[0].mxu0
      %v1665 = vadd.f32 0.0, %v1664
      %v1666 = vpop.f32.mrb[0].mxu0
      %v1667 = vpop.f32.mrb[0].mxu0
      %v1668 = vadd.f32 0.0, %v1667
      %v1669 = vpop.f32.mrb[0].mxu0
      %1670 = vmatprep.mubr.bf16.mxu0 0
      %1671 = vmatmul.mubr.bf16.gmra.mrb[0].mxu0 %v525
      %v1672 = vpop.f32.mrb[0].mxu0
      %v1673 = vadd.f32 0.0, %v1672
      %v1674 = vpop.f32.mrb[0].mxu0
      %v1675 = vpop.f32.mrb[0].mxu0
      %v1676 = vadd.f32 0.0, %v1675
      %v1677 = vpop.f32.mrb[0].mxu0
      %1678 = vmatprep.mubr.bf16.mxu0 0
      %1679 = vmatmul.mubr.bf16.gmra.mrb[0].mxu0 %v1182
      %v1680 = vpop.f32.mrb[0].mxu0
      %v1681 = vadd.f32 0.0, %v1680
      %v1682 = vpop.f32.mrb[0].mxu0
      %v1683 = vpop.f32.mrb[0].mxu0
      %v1684 = vadd.f32 0.0, %v1683
      %v1685 = vpop.f32.mrb[0].mxu0
      %1686 = vmatprep.mubr.bf16.mxu0 0
      %1687 = vmatmul.mubr.bf16.gmra.mrb[0].mxu0 %v1593
      %v1688 = vpop.f32.mrb[0].mxu0
      %v1689 = vadd.f32 0.0, %v1688
      %v1690 = vpop.f32.mrb[0].mxu0
      %v1691 = vpop.f32.mrb[0].mxu0
      %v1692 = vadd.f32 0.0, %v1691
      %v1693 = vpop.f32.mrb[0].mxu0
      %1694 = vdwg.mxu0
      %v1695 = vadd.f32 %v1544, %v1633
      %v1696 = vadd.f32 %v1545, %v1636
      %v1697 = vadd.f32 %v1546, %v1641
      %v1698 = vadd.f32 %v1547, %v1644
      %v1699 = vadd.f32 %v1548, %v1649
      %v1700 = vadd.f32 %v1549, %v1652
      %v1701 = vadd.f32 %v1550, %v1657
      %v1702 = vadd.f32 %v1551, %v1660
      %v1703 = vadd.f32 %v1552, %v1665
      %v1704 = vadd.f32 %v1553, %v1668
      %v1705 = vadd.f32 %v1554, %v1673
      %v1706 = vadd.f32 %v1555, %v1676
      %v1707 = vadd.f32 %v1556, %v1681
      %v1708 = vadd.f32 %v1557, %v1684
      %v1709 = vadd.f32 %v1558, %v1689
      %v1710 = vadd.f32 %v1559, %v1692
      %v1711 = vld [vmem:[%s224 + $0x10] sm:$0x3]
      %v1713 = vrot.slane %v274, 5
      %v1714 = vrot.slane %v1713, 4
      %v1715 = vrot.slane %v275, 5
      %v1716 = vsel %vm803, %v1714, %v1715
      %v1717 = vrot.slane %v1715, 4
      %v1718 = vrot.slane %v276, 5
      %v1719 = vsel %vm803, %v1717, %v1718
      %v1720 = vunpack.c.l.b16 %v1716
      %v1721 = vunpack.c.l.b16 %v1719
      %v1722 = vpack.c.b16 %v1721, %v1720
      %v1724 = vsel %vm502, %v1722, 0
      %v1727 = vsel %vm527, %v1711, 0
      %1729 = vmatprep.subr.bf16.mxu0 0
      %1730 = vmatpush1.bf16.msra.mxu0 %v1727
      %1731 = vmatprep.subr.bf16.mxu0 0
      %1732 = vmatpush1.bf16.msra.mxu0 0
      %1733 = vmatprep.subr.bf16.mxu0 0
      %1734 = vmatpush1.bf16.msra.mxu0 0
      %1735 = vmatprep.subr.bf16.mxu0 0
      %1736 = vmatpush1.bf16.msra.mxu0 0
      %1737 = vmatprep.subr.bf16.mxu0 0
      %1738 = vmatpush1.bf16.msra.mxu0 0
      %1739 = vmatprep.subr.bf16.mxu0 0
      %1740 = vmatpush1.bf16.msra.mxu0 0
      %1741 = vmatprep.subr.bf16.mxu0 0
      %1742 = vmatpush1.bf16.msra.mxu0 0
      %1743 = vmatprep.subr.bf16.mxu0 0
      %1744 = vmatpush1.bf16.msra.mxu0 0
      %1745 = vmatprep.subr.bf16.mxu0 0
      %1746 = vmatpush1.bf16.msra.mxu0 0
      %1747 = vmatprep.subr.bf16.mxu0 0
      %1748 = vmatpush1.bf16.msra.mxu0 0
      %1749 = vmatprep.subr.bf16.mxu0 0
      %1750 = vmatpush1.bf16.msra.mxu0 0
      %1751 = vmatprep.subr.bf16.mxu0 0
      %1752 = vmatpush1.bf16.msra.mxu0 0
      %1753 = vmatprep.subr.bf16.mxu0 0
      %1754 = vmatpush1.bf16.msra.mxu0 0
      %1755 = vmatprep.subr.bf16.mxu0 0
      %1756 = vmatpush1.bf16.msra.mxu0 0
      %1757 = vmatprep.subr.bf16.mxu0 0
      %1758 = vmatpush1.bf16.msra.mxu0 0
      %1759 = vmatprep.subr.bf16.mxu0 0
      %1760 = vmatpush1.bf16.msra.mxu0 0
      %1761 = vmatprep.mubr.bf16.mxu0 0
      %1762 = vmatmul.mubr.bf16.gmra.mrb[0].mxu0 %v891
      %v1763 = vpop.f32.mrb[0].mxu0
      %v1764 = vadd.f32 0.0, %v1763
      %v1765 = vpop.f32.mrb[0].mxu0
      %v1766 = vpop.f32.mrb[0].mxu0
      %v1767 = vadd.f32 0.0, %v1766
      %v1768 = vpop.f32.mrb[0].mxu0
      %1769 = vmatprep.mubr.bf16.mxu0 0
      %1770 = vmatmul.mubr.bf16.gmra.mrb[0].mxu0 %v894
      %v1771 = vpop.f32.mrb[0].mxu0
      %v1772 = vadd.f32 0.0, %v1771
      %v1773 = vpop.f32.mrb[0].mxu0
      %v1774 = vpop.f32.mrb[0].mxu0
      %v1775 = vadd.f32 0.0, %v1774
      %v1776 = vpop.f32.mrb[0].mxu0
      %1777 = vmatprep.mubr.bf16.mxu0 0
      %1778 = vmatmul.mubr.bf16.gmra.mrb[0].mxu0 %v897
      %v1779 = vpop.f32.mrb[0].mxu0
      %v1780 = vadd.f32 0.0, %v1779
      %v1781 = vpop.f32.mrb[0].mxu0
      %v1782 = vpop.f32.mrb[0].mxu0
      %v1783 = vadd.f32 0.0, %v1782
      %v1784 = vpop.f32.mrb[0].mxu0
      %1785 = vmatprep.mubr.bf16.mxu0 0
      %1786 = vmatmul.mubr.bf16.gmra.mrb[0].mxu0 %v900
      %v1787 = vpop.f32.mrb[0].mxu0
      %v1788 = vadd.f32 0.0, %v1787
      %v1789 = vpop.f32.mrb[0].mxu0
      %v1790 = vpop.f32.mrb[0].mxu0
      %v1791 = vadd.f32 0.0, %v1790
      %v1792 = vpop.f32.mrb[0].mxu0
      %1793 = vmatprep.mubr.bf16.mxu0 0
      %1794 = vmatmul.mubr.bf16.gmra.mrb[0].mxu0 %v903
      %v1795 = vpop.f32.mrb[0].mxu0
      %v1796 = vadd.f32 0.0, %v1795
      %v1797 = vpop.f32.mrb[0].mxu0
      %v1798 = vpop.f32.mrb[0].mxu0
      %v1799 = vadd.f32 0.0, %v1798
      %v1800 = vpop.f32.mrb[0].mxu0
      %1801 = vmatprep.mubr.bf16.mxu0 0
      %1802 = vmatmul.mubr.bf16.gmra.mrb[0].mxu0 %v906
      %v1803 = vpop.f32.mrb[0].mxu0
      %v1804 = vadd.f32 0.0, %v1803
      %v1805 = vpop.f32.mrb[0].mxu0
      %v1806 = vpop.f32.mrb[0].mxu0
      %v1807 = vadd.f32 0.0, %v1806
      %v1808 = vpop.f32.mrb[0].mxu0
      %1809 = vmatprep.mubr.bf16.mxu0 0
      %1810 = vmatmul.mubr.bf16.gmra.mrb[0].mxu0 %v1317
      %v1811 = vpop.f32.mrb[0].mxu0
      %v1812 = vadd.f32 0.0, %v1811
      %v1813 = vpop.f32.mrb[0].mxu0
      %v1814 = vpop.f32.mrb[0].mxu0
      %v1815 = vadd.f32 0.0, %v1814
      %v1816 = vpop.f32.mrb[0].mxu0
      %1817 = vmatprep.mubr.bf16.mxu0 0
      %1818 = vmatmul.mubr.bf16.gmra.mrb[0].mxu0 %v1724
      %v1819 = vpop.f32.mrb[0].mxu0
      %v1820 = vadd.f32 0.0, %v1819
      %v1821 = vpop.f32.mrb[0].mxu0
      %v1822 = vpop.f32.mrb[0].mxu0
      %v1823 = vadd.f32 0.0, %v1822
      %v1824 = vpop.f32.mrb[0].mxu0
      %1825 = vdwg.mxu0
      %v1826 = vadd.f32 %v1695, %v1764
      %v1827 = vadd.f32 %v1696, %v1767
      %v1828 = vadd.f32 %v1697, %v1772
      %v1829 = vadd.f32 %v1698, %v1775
      %v1830 = vadd.f32 %v1699, %v1780
      %v1831 = vadd.f32 %v1700, %v1783
      %v1832 = vadd.f32 %v1701, %v1788
      %v1833 = vadd.f32 %v1702, %v1791
      %v1834 = vadd.f32 %v1703, %v1796
      %v1835 = vadd.f32 %v1704, %v1799
      %v1836 = vadd.f32 %v1705, %v1804
      %v1837 = vadd.f32 %v1706, %v1807
      %v1838 = vadd.f32 %v1707, %v1812
      %v1839 = vadd.f32 %v1708, %v1815
      %v1840 = vadd.f32 %v1709, %v1820
      %v1841 = vadd.f32 %v1710, %v1823
      %v1842 = vld [vmem:[%s227] sm:$0x1]
      %v1844 = vlaneseq
      %v1845 = vshrl.u32 %v1844, 7
      %v1846 = vsub.s32 0, %v1845
      %v1847 = vrot.slane %v1842, %v1846
      %v1849 = vadd.f32 %v1826, %v1847
      %v1850 = vadd.f32 %v1827, %v1847
      %v1851 = vadd.f32 %v1828, %v1847
      %v1852 = vadd.f32 %v1829, %v1847
      %v1853 = vadd.f32 %v1830, %v1847
      %v1854 = vadd.f32 %v1831, %v1847
      %v1855 = vadd.f32 %v1832, %v1847
      %v1856 = vadd.f32 %v1833, %v1847
      %v1857 = vadd.f32 %v1834, %v1847
      %v1858 = vadd.f32 %v1835, %v1847
      %v1859 = vadd.f32 %v1836, %v1847
      %v1860 = vadd.f32 %v1837, %v1847
      %v1861 = vadd.f32 %v1838, %v1847
      %v1862 = vadd.f32 %v1839, %v1847
      %v1863 = vadd.f32 %v1840, %v1847
      %v1864 = vadd.f32 %v1841, %v1847
      %v1865 = vxor.u32 %v1849, 2147483648
      %v1866 = vxor.u32 %v1850, 2147483648
      %v1867 = vxor.u32 %v1851, 2147483648
      %v1868 = vxor.u32 %v1852, 2147483648
      %v1869 = vxor.u32 %v1853, 2147483648
      %v1870 = vxor.u32 %v1854, 2147483648
      %v1871 = vxor.u32 %v1855, 2147483648
      %v1872 = vxor.u32 %v1856, 2147483648
      %v1873 = vxor.u32 %v1857, 2147483648
      %v1874 = vxor.u32 %v1858, 2147483648
      %v1875 = vxor.u32 %v1859, 2147483648
      %v1876 = vxor.u32 %v1860, 2147483648
      %v1877 = vxor.u32 %v1861, 2147483648
      %v1878 = vxor.u32 %v1862, 2147483648
      %v1879 = vxor.u32 %v1863, 2147483648
      %v1880 = vxor.u32 %v1864, 2147483648
      %v1881 = vmul.f32 %v1865, 1.442695
      %v1882 = vpow.pop %v1881
      %v1883 = vmul.f32 %v1866, 1.442695
      %v1884 = vpow.pop %v1883
      %v1885 = vmul.f32 %v1867, 1.442695
      %v1886 = vpow.pop %v1885
      %v1887 = vmul.f32 %v1868, 1.442695
      %v1888 = vpow.pop %v1887
      %v1889 = vmul.f32 %v1869, 1.442695
      %v1890 = vpow.pop %v1889
      %v1891 = vmul.f32 %v1870, 1.442695
      %v1892 = vpow.pop %v1891
      %v1893 = vmul.f32 %v1871, 1.442695
      %v1894 = vpow.pop %v1893
      %v1895 = vmul.f32 %v1872, 1.442695
      %v1896 = vpow.pop %v1895
      %v1897 = vmul.f32 %v1873, 1.442695
      %v1898 = vpow.pop %v1897
      %v1899 = vmul.f32 %v1874, 1.442695
      %v1900 = vpow.pop %v1899
      %v1901 = vmul.f32 %v1875, 1.442695
      %v1902 = vpow.pop %v1901
      %v1903 = vmul.f32 %v1876, 1.442695
      %v1904 = vpow.pop %v1903
      %v1905 = vmul.f32 %v1877, 1.442695
      %v1906 = vpow.pop %v1905
      %v1907 = vmul.f32 %v1878, 1.442695
      %v1908 = vpow.pop %v1907
      %v1909 = vmul.f32 %v1879, 1.442695
      %v1910 = vpow.pop %v1909
      %v1911 = vmul.f32 %v1880, 1.442695
      %v1912 = vpow.pop %v1911
      %v1913 = vadd.f32 %v1882, 1.0
      %v1914 = vadd.f32 %v1884, 1.0
      %v1915 = vadd.f32 %v1886, 1.0
      %v1916 = vadd.f32 %v1888, 1.0
      %v1917 = vadd.f32 %v1890, 1.0
      %v1918 = vadd.f32 %v1892, 1.0
      %v1919 = vadd.f32 %v1894, 1.0
      %v1920 = vadd.f32 %v1896, 1.0
      %v1921 = vadd.f32 %v1898, 1.0
      %v1922 = vadd.f32 %v1900, 1.0
      %v1923 = vadd.f32 %v1902, 1.0
      %v1924 = vadd.f32 %v1904, 1.0
      %v1925 = vadd.f32 %v1906, 1.0
      %v1926 = vadd.f32 %v1908, 1.0
      %v1927 = vadd.f32 %v1910, 1.0
      %v1928 = vadd.f32 %v1912, 1.0
      %v1929 = vrcp.pop %v1913
      %v1930 = vmul.f32 1.0, %v1929
      %v1931 = vrcp.pop %v1914
      %v1932 = vmul.f32 1.0, %v1931
      %v1933 = vrcp.pop %v1915
      %v1934 = vmul.f32 1.0, %v1933
      %v1935 = vrcp.pop %v1916
      %v1936 = vmul.f32 1.0, %v1935
      %v1937 = vrcp.pop %v1917
      %v1938 = vmul.f32 1.0, %v1937
      %v1939 = vrcp.pop %v1918
      %v1940 = vmul.f32 1.0, %v1939
      %v1941 = vrcp.pop %v1919
      %v1942 = vmul.f32 1.0, %v1941
      %v1943 = vrcp.pop %v1920
      %v1944 = vmul.f32 1.0, %v1943
      %v1945 = vrcp.pop %v1921
      %v1946 = vmul.f32 1.0, %v1945
      %v1947 = vrcp.pop %v1922
      %v1948 = vmul.f32 1.0, %v1947
      %v1949 = vrcp.pop %v1923
      %v1950 = vmul.f32 1.0, %v1949
      %v1951 = vrcp.pop %v1924
      %v1952 = vmul.f32 1.0, %v1951
      %v1953 = vrcp.pop %v1925
      %v1954 = vmul.f32 1.0, %v1953
      %v1955 = vrcp.pop %v1926
      %v1956 = vmul.f32 1.0, %v1955
      %v1957 = vrcp.pop %v1927
      %v1958 = vmul.f32 1.0, %v1957
      %v1959 = vrcp.pop %v1928
      %v1960 = vmul.f32 1.0, %v1959
      %v1961 = vmul.f32 %v1849, %v1930
      %v1962 = vmul.f32 %v1850, %v1932
      %v1963 = vmul.f32 %v1851, %v1934
      %v1964 = vmul.f32 %v1852, %v1936
      %v1965 = vmul.f32 %v1853, %v1938
      %v1966 = vmul.f32 %v1854, %v1940
      %v1967 = vmul.f32 %v1855, %v1942
      %v1968 = vmul.f32 %v1856, %v1944
      %v1969 = vmul.f32 %v1857, %v1946
      %v1970 = vmul.f32 %v1858, %v1948
      %v1971 = vmul.f32 %v1859, %v1950
      %v1972 = vmul.f32 %v1860, %v1952
      %v1973 = vmul.f32 %v1861, %v1954
      %v1974 = vmul.f32 %v1862, %v1956
      %v1975 = vmul.f32 %v1863, %v1958
      %v1976 = vmul.f32 %v1864, %v1960
      %vm1977 = vcmask 64512
      %1978 = vst.msk [vmem:[%s240] sm:$0xff] %vm1977, %v1961
      %1979 = vst.msk [vmem:[%s240 + $0x8] sm:$0xff] %vm1977, %v1962
      %1980 = vst.msk [vmem:[%s240 + $0x10] sm:$0xff] %vm1977, %v1963
      %1981 = vst.msk [vmem:[%s240 + $0x18] sm:$0xff] %vm1977, %v1964
      %1982 = vst.msk [vmem:[%s240 + $0x20] sm:$0xff] %vm1977, %v1965
      %1983 = vst.msk [vmem:[%s240 + $0x28] sm:$0xff] %vm1977, %v1966
      %1984 = vst.msk [vmem:[%s240 + $0x30] sm:$0xff] %vm1977, %v1967
      %1985 = vst.msk [vmem:[%s240 + $0x38] sm:$0xff] %vm1977, %v1968
      %1986 = vst.msk [vmem:[%s240 + $0x40] sm:$0xff] %vm1977, %v1969
      %1987 = vst.msk [vmem:[%s240 + $0x48] sm:$0xff] %vm1977, %v1970
      %1988 = vst.msk [vmem:[%s240 + $0x50] sm:$0xff] %vm1977, %v1971
      %1989 = vst.msk [vmem:[%s240 + $0x58] sm:$0xff] %vm1977, %v1972
      %1990 = vst.msk [vmem:[%s240 + $0x60] sm:$0xff] %vm1977, %v1973
      %1991 = vst.msk [vmem:[%s240 + $0x68] sm:$0xff] %vm1977, %v1974
      %1992 = vst.msk [vmem:[%s240 + $0x70] sm:$0xff] %vm1977, %v1975
      %1993 = vst.msk [vmem:[%s240 + $0x78] sm:$0xff] %vm1977, %v1976
      %s1994 = smul.u32 8, %s20
      %p1995 = scmp.lt.s32.totalorder %s19, 1
      %s1996 = scalar_select %p1995, %s19, 1
      %p1997 = scmp.lt.s32.totalorder %s1994, 15
      %s1998 = scalar_select %p1997, %s1994, 15
      %p1999 = scmp.lt.s32.totalorder %s21, 0
      %s2000 = scalar_select %p1999, %s21, 0
      %s2001 = smul.addr %s1998, 2
      %s2002 = sadd.s32 %s2000, %s2001
      %s2003 = smul.addr %s1996, 32
      %s2004 = sadd.s32 %s2002, %s2003
      %s2005 = smul.addr %s2004, 8
      %s2006 = scalar_lea.vmem %s3, %s2005
      // Predicated region
      $region33: #{_conv_bn_silu_impl.1} parent=31 // pred_check
        %p2007 = pneg %p133
      $region34: #{_conv_bn_silu_impl.1} parent=31 // pred_check_branch
        %2009 = sbr.rel (%p2007) target = $region36
      $region35: #{_conv_bn_silu_impl.1} parent=31 // pred_region
        %s2010 = smul.u32 8, %s20
      $region36: #{_conv_bn_silu_impl.1} parent=31 // pred_fallthru
        _
    $region32: #{_conv_bn_silu_impl.1} parent=5 // pred_fallthru
      _
    %p2011 = scmp.le.s32.totalorder 2, %s9
    // Predicated region
    $region37: #{_conv_bn_silu_impl.1} parent=5 // pred_check
      %p2012 = pneg %p2011
    $region38: #{_conv_bn_silu_impl.1} parent=5 // pred_check_branch
      %2014 = sbr.rel (%p2012) target = $region40
    $region39: #{_conv_bn_silu_impl.1} parent=5 // pred_region
      %s2015 = ssub.s32 %s9, 2
      // Predicated region
      $region41: #{_conv_bn_silu_impl.1} parent=39 // pred_check
        %p2016 = pneg %p139
      $region42: #{_conv_bn_silu_impl.1} parent=39 // pred_check_branch
        %2018 = sbr.rel (%p2016) target = $region44
      $region43: #{_conv_bn_silu_impl.1} parent=39 // pred_region
        %s2019 = smul.u32 8, %s23
        %p2020 = scmp.lt.s32.totalorder %s22, 1
        %s2021 = scalar_select %p2020, %s22, 1
        %p2022 = scmp.lt.s32.totalorder %s2019, 15
        %s2023 = scalar_select %p2022, %s2019, 15
        %p2024 = scmp.lt.s32.totalorder %s24, 0
        %s2025 = scalar_select %p2024, %s24, 0
        %s2026 = smul.addr %s2023, 2
        %s2027 = sadd.s32 %s2025, %s2026
        %s2028 = smul.addr %s2021, 32
        %s2029 = sadd.s32 %s2027, %s2028
        %s2030 = smul.addr %s2029, 8
        %s2031 = scalar_lea.vmem %s3, %s2030
      $region44: #{_conv_bn_silu_impl.1} parent=39 // pred_fallthru
        _
    $region40: #{_conv_bn_silu_impl.1} parent=5 // pred_fallthru
      _
  $region6: #{_conv_bn_silu_impl.1} parent=0 // loop_footer
    %s13 = sadd.s32 1, %s9
  $region7: #{_conv_bn_silu_impl.1} parent=0 // loop_footer_branch
    %8 = sbr.rel target = $region3
  $region8: #{_conv_bn_silu_impl.1} parent=0 // loop_exit
    _

</llo_original>
